<compile_context>
chip_gen: v6e
topology: v6e:2x2x1
jax: 0.10.0
libtpu: 0.0.40
codegen_flags: <defaults>
</compile_context>

<pallas_src>
import functools

import jax
import jax.numpy as jnp
from jax.experimental import pallas as pl
from jax.experimental.pallas import tpu as pltpu


def mlp_kernel_single(x_ref, w1_ref, b1_ref, w2_ref, b2_ref, o_ref):
    """Specialized single-step fused forward (grid == (1,)).

    x_ref:  (B, IN)  f32    full input
    w1_ref: (IN, H)  bf16   full first weight
    b1_ref: (1, H)   f32
    w2_ref: (H, OUT) f32
    b2_ref: (1, OUT) f32
    o_ref:  (B, OUT) f32
    """
    # bf16 x bf16 -> f32 accumulate on the MXU (native mode on all gens).
    x_bf16 = x_ref[...].astype(jnp.bfloat16)
    h = jnp.dot(x_bf16, w1_ref[...], preferred_element_type=jnp.float32)
    h = jnp.maximum(h + b1_ref[...], 0.0)  # bias + ReLU
    out = (
        jnp.dot(h, w2_ref[...], preferred_element_type=jnp.float32)
        + b2_ref[...]
    )
    o_ref[...] = out.astype(o_ref.dtype)


def mlp_kernel_tiled(x_ref, w1_ref, b1_ref, w2_ref, b2_ref, o_ref, h_acc):
    """K-tiled fallback (only used when the caller forces tk < IN)."""
    k = pl.program_id(0)

    @pl.when(k == 0)
    def _init():
        # Fold the layer-1 bias into the accumulator init.
        h_acc[...] = jnp.broadcast_to(b1_ref[...], h_acc.shape).astype(
            jnp.float32
        )

    x_bf16 = x_ref[...].astype(jnp.bfloat16)
    h_acc[...] += jnp.dot(
        x_bf16, w1_ref[...], preferred_element_type=jnp.float32
    )

    @pl.when(k == pl.num_programs(0) - 1)
    def _finalize():
        h = jnp.maximum(h_acc[...], 0.0)
        out = (
            jnp.dot(h, w2_ref[...], preferred_element_type=jnp.float32)
            + b2_ref[...]
        )
        o_ref[...] = out.astype(o_ref.dtype)


@functools.partial(jax.jit, static_argnames=("tk",))
def myreg_forward(x, w1, b1, w2, b2, *, tk=None):
    """Fused MyReg forward.

    tk=None (default) -> single grid step (tk = IN), specialized kernel.
    tk < IN           -> K-tiled accumulator fallback (for very large IN).
    """
    B, IN = x.shape
    H = w1.shape[1]
    OUT = w2.shape[1]
    if tk is None:
        tk = IN
    assert IN % tk == 0
    n_steps = IN // tk

    if n_steps == 1:
        return pl.pallas_call(
            mlp_kernel_single,
            out_shape=jax.ShapeDtypeStruct((B, OUT), x.dtype),
            grid_spec=pltpu.PrefetchScalarGridSpec(
                num_scalar_prefetch=0,
                grid=(1,),
                in_specs=[
                    pl.BlockSpec((B, IN), lambda k: (0, 0)),     # x (full)
                    pl.BlockSpec((IN, H), lambda k: (0, 0)),     # w1 (full, bf16)
                    pl.BlockSpec((1, H), lambda k: (0, 0)),      # b1
                    pl.BlockSpec((H, OUT), lambda k: (0, 0)),    # w2
                    pl.BlockSpec((1, OUT), lambda k: (0, 0)),    # b2
                ],
                out_specs=pl.BlockSpec((B, OUT), lambda k: (0, 0)),
            ),
            compiler_params=pltpu.CompilerParams(
                dimension_semantics=("arbitrary",),
            ),
        )(x, w1, b1, w2, b2)

    # K-tiled fallback path.
    return pl.pallas_call(
        mlp_kernel_tiled,
        out_shape=jax.ShapeDtypeStruct((B, OUT), x.dtype),
        grid_spec=pltpu.PrefetchScalarGridSpec(
            num_scalar_prefetch=0,
            grid=(n_steps,),
            in_specs=[
                pl.BlockSpec((B, tk), lambda k: (0, k)),         # x tile
                pl.BlockSpec((tk, H), lambda k: (k, 0)),         # w1 tile
                pl.BlockSpec((1, H), lambda k: (0, 0)),          # b1
                pl.BlockSpec((H, OUT), lambda k: (0, 0)),        # w2
                pl.BlockSpec((1, OUT), lambda k: (0, 0)),        # b2
            ],
            out_specs=pl.BlockSpec((B, OUT), lambda k: (0, 0)),
            scratch_shapes=[pltpu.VMEM((B, H), jnp.float32)],
        ),
        compiler_params=pltpu.CompilerParams(
            dimension_semantics=("arbitrary",),
        ),
    )(x, w1, b1, w2, b2)


def init_params(key, in_features, hidden, out_features):
    """Init mirroring torch.nn.Linear's U(-1/sqrt(fan_in), +); w1 stored bf16."""
    k1, k2, k3, k4 = jax.random.split(key, 4)
    bound1 = 1.0 / jnp.sqrt(in_features)
    bound2 = 1.0 / jnp.sqrt(hidden)
    w1 = jax.random.uniform(
        k1, (in_features, hidden), jnp.float32, -bound1, bound1
    ).astype(jnp.bfloat16)  # dominant HBM stream stored narrow
    b1 = jax.random.uniform(k2, (1, hidden), jnp.float32, -bound1, bound1)
    w2 = jax.random.uniform(
        k3, (hidden, out_features), jnp.float32, -bound2, bound2
    )
    b2 = jax.random.uniform(
        k4, (1, out_features), jnp.float32, -bound2, bound2
    )
    return w1, b1, w2, b2


if __name__ == "__main__":
    # Matches MyReg(64*64, 2) with the spec's test input torch.rand([16, 4096]).
    B, IN, H, OUT = 16, 64 * 64, 128, 2

    key = jax.random.PRNGKey(0)
    kx, kp = jax.random.split(key)
    x = jax.random.uniform(kx, (B, IN), jnp.float32)  # torch.rand analogue
    w1, b1, w2, b2 = init_params(kp, IN, H, OUT)

    # Default: single-step specialized kernel (tk = IN).
    out = jax.block_until_ready(myreg_forward(x, w1, b1, w2, b2))
    assert out.shape == (B, OUT)

    # Reference matching the kernel's math exactly (bf16 inputs, f32 accum).
    x16 = x.astype(jnp.bfloat16).astype(jnp.float32)
    w1f = w1.astype(jnp.float32)
    ref = jnp.maximum(x16 @ w1f + b1, 0.0) @ w2 + b2
    assert jnp.allclose(out, ref, atol=1e-3, rtol=1e-3)

    # Loose semantic check against the full-f32 forward (bf16 quantization noise).
    ref_f32 = jnp.maximum(x @ w1f + b1, 0.0) @ w2 + b2
    assert jnp.allclose(out, ref_f32, atol=3e-2, rtol=3e-2)

    # Also exercise the K-tiled fallback path once.
    out_t = jax.block_until_ready(myreg_forward(x, w1, b1, w2, b2, tk=1024))
    assert jnp.allclose(out_t, ref, atol=1e-3, rtol=1e-3)

    print("KERNEL_OK")
</pallas_src>

<mosaic_0001>
module attributes {stable_mosaic.version = 11 : i64} {
  func.func @mlp_kernel_single(%arg0: i32, %arg1: memref<16x4096xf32, #tpu.memory_space<vmem>>, %arg2: memref<4096x128xbf16, #tpu.memory_space<vmem>>, %arg3: memref<1x128xf32, #tpu.memory_space<vmem>>, %arg4: memref<128x2xf32, #tpu.memory_space<vmem>>, %arg5: memref<1x2xf32, #tpu.memory_space<vmem>>, %arg6: memref<16x2xf32, #tpu.memory_space<vmem>>) attributes {dimension_semantics = [#tpu.dimension_semantics<arbitrary>], iteration_bounds = array<i64: 1>, scalar_prefetch = 0 : i64, scratch_operands = 0 : i64, tpu.core_type = #tpu.core_type<tc>, window_params = [{pipeline_mode = #tpu.pipeline_mode<synchronous>, transform_indices = @transform_0, window_bounds = array<i64: 16, 4096>}, {pipeline_mode = #tpu.pipeline_mode<synchronous>, transform_indices = @transform_1, window_bounds = array<i64: 4096, 128>}, {pipeline_mode = #tpu.pipeline_mode<synchronous>, transform_indices = @transform_2, window_bounds = array<i64: 1, 128>}, {pipeline_mode = #tpu.pipeline_mode<synchronous>, transform_indices = @transform_3, window_bounds = array<i64: 128, 2>}, {pipeline_mode = #tpu.pipeline_mode<synchronous>, transform_indices = @transform_4, window_bounds = array<i64: 1, 2>}, {pipeline_mode = #tpu.pipeline_mode<synchronous>, transform_indices = @transform_5, window_bounds = array<i64: 16, 2>}]} {
    %c0 = arith.constant 0 : index
    %c0_0 = arith.constant 0 : index
    %0 = vector.load %arg1[%c0, %c0_0] : memref<16x4096xf32, #tpu.memory_space<vmem>>, vector<16x4096xf32>
    %1 = arith.truncf %0 : vector<16x4096xf32> to vector<16x4096xbf16>
    %c0_1 = arith.constant 0 : index
    %c0_2 = arith.constant 0 : index
    %2 = vector.load %arg2[%c0_1, %c0_2] : memref<4096x128xbf16, #tpu.memory_space<vmem>>, vector<4096x128xbf16>
    %cst = arith.constant dense<0.000000e+00> : vector<16x128xf32>
    %3 = tpu.matmul %1, %2, %cst {dimension_numbers = #tpu.dot_dimension_numbers<[1], [0], [0], [1], [0, 0, 1, 1], [], []>} : vector<16x4096xbf16>, vector<4096x128xbf16>, vector<16x128xf32> -> vector<16x128xf32>
    %c0_3 = arith.constant 0 : index
    %c0_4 = arith.constant 0 : index
    %4 = vector.load %arg3[%c0_3, %c0_4] : memref<1x128xf32, #tpu.memory_space<vmem>>, vector<1x128xf32>
    %5 = vector.broadcast %4 : vector<1x128xf32> to vector<16x128xf32>
    %6 = arith.addf %3, %5 : vector<16x128xf32>
    %cst_5 = arith.constant 0.000000e+00 : f32
    %7 = vector.broadcast %cst_5 : f32 to vector<16x128xf32>
    %8 = arith.maximumf %6, %7 : vector<16x128xf32>
    %c0_6 = arith.constant 0 : index
    %c0_7 = arith.constant 0 : index
    %9 = vector.load %arg4[%c0_6, %c0_7] : memref<128x2xf32, #tpu.memory_space<vmem>>, vector<128x2xf32>
    %cst_8 = arith.constant dense<0.000000e+00> : vector<16x2xf32>
    %10 = tpu.matmul %8, %9, %cst_8 {dimension_numbers = #tpu.dot_dimension_numbers<[1], [0], [0], [1], [0, 0, 1, 1], [], []>} : vector<16x128xf32>, vector<128x2xf32>, vector<16x2xf32> -> vector<16x2xf32>
    %c0_9 = arith.constant 0 : index
    %c0_10 = arith.constant 0 : index
    %11 = vector.load %arg5[%c0_9, %c0_10] : memref<1x2xf32, #tpu.memory_space<vmem>>, vector<1x2xf32>
    %12 = vector.broadcast %11 : vector<1x2xf32> to vector<16x2xf32>
    %13 = arith.addf %10, %12 : vector<16x2xf32>
    %c0_11 = arith.constant 0 : index
    %c0_12 = arith.constant 0 : index
    %14 = vector.load %arg6[%c0_11, %c0_12] : memref<16x2xf32, #tpu.memory_space<vmem>>, vector<16x2xf32>
    tpu.vector_store %arg6[%c0_11, %c0_12], %13 {strides = array<i32>} : memref<16x2xf32, #tpu.memory_space<vmem>>, vector<16x2xf32>,
    return
  }
  func.func @transform_0(%arg0: i32) -> (i32, i32) {
    %c0_i32 = arith.constant 0 : i32
    %c0_i32_0 = arith.constant 0 : i32
    %c0_i32_1 = arith.constant 0 : i32
    return %c0_i32, %c0_i32_0 : i32, i32
  }
  func.func @transform_1(%arg0: i32) -> (i32, i32) {
    %c0_i32 = arith.constant 0 : i32
    %c0_i32_0 = arith.constant 0 : i32
    %c0_i32_1 = arith.constant 0 : i32
    return %c0_i32, %c0_i32_0 : i32, i32
  }
  func.func @transform_2(%arg0: i32) -> (i32, i32) {
    %c0_i32 = arith.constant 0 : i32
    %c0_i32_0 = arith.constant 0 : i32
    %c0_i32_1 = arith.constant 0 : i32
    return %c0_i32, %c0_i32_0 : i32, i32
  }
  func.func @transform_3(%arg0: i32) -> (i32, i32) {
    %c0_i32 = arith.constant 0 : i32
    %c0_i32_0 = arith.constant 0 : i32
    %c0_i32_1 = arith.constant 0 : i32
    return %c0_i32, %c0_i32_0 : i32, i32
  }
  func.func @transform_4(%arg0: i32) -> (i32, i32) {
    %c0_i32 = arith.constant 0 : i32
    %c0_i32_0 = arith.constant 0 : i32
    %c0_i32_1 = arith.constant 0 : i32
    return %c0_i32, %c0_i32_0 : i32, i32
  }
  func.func @transform_5(%arg0: i32) -> (i32, i32) {
    %c0_i32 = arith.constant 0 : i32
    %c0_i32_0 = arith.constant 0 : i32
    %c0_i32_1 = arith.constant 0 : i32
    return %c0_i32, %c0_i32_0 : i32, i32
  }
}

</mosaic_0001>

<llo_original>
// kernel: myreg_forward.1
$region0: #{myreg_forward.1}
  #allocation0 [shape = 'u32[]', space=smem, size = 0x4, offset = 0x4, fixed_abs, tag = 'smem constant byte address 0x4 - core index']
  #allocation1 [shape = 'u32[144,128]{1,0:T(1,128)}', space=vmem, size = 0x12000, scoped, tag = 'internal scratch']
  %s0 = inlined_call_operand.hbm [shape: f32[16,4096], index: 0, kind: input, shape index: {}]
  %s1 = inlined_call_operand.hbm [shape: bf16[4096,128], index: 1, kind: input, shape index: {}]
  %s2 = inlined_call_operand.vmem [shape: f32[1,128], index: 2, kind: input, shape index: {}]
  %s3 = inlined_call_operand.vmem [shape: f32[128,2], index: 3, kind: input, shape index: {}]
  %s4 = inlined_call_operand.vmem [shape: f32[1,2], index: 4, kind: input, shape index: {}]
  %s5 = inlined_call_operand.vmem [shape: f32[16,2], index: 5, kind: output, shape index: {}]
  %s6 = sld [smem:[#allocation0]]
  $region38: #{myreg_forward.1} parent=0
    _
  %s8 = ssub.s32 1, %s6
  %s9 = scalar_select 0, %s8, %s6
  $region1: #{myreg_forward.1} parent=0
    #allocation2 [shape = 'u8[262144]{0}', space=vmem, size = 0x40000, scoped, tag = 'input window, operand 0, single buffered']
    #allocation3 [shape = 's32[1]{0}', space=sflag, size = 0x4, scoped, tag = 'scoped memory for myreg_forward.1']
    #allocation4 [shape = 'u8[1048576]{0}', space=vmem, size = 0x100000, scoped, tag = 'input window, operand 1, single buffered']
    #allocation5 [shape = 's32[1]{0}', space=sflag, size = 0x4, scoped, tag = 'scoped memory for myreg_forward.1']
    %10 = vsyncpa [#allocation3], 0
    %11 = vsyncpa [#allocation5], 0
    // Predicated region
    $region2: #{myreg_forward.1} parent=1 // pred_check
      _
    $region3: #{myreg_forward.1} parent=1 // pred_check_branch
      %13 = sbr.rel (0) target = $region5
    $region4: #{myreg_forward.1} parent=1 // pred_region
      %s15 = ssub.s32 8192, 8192
      %16 = vsyncadd [#allocation3], %s15
      %s17 = sshll.u32 [#allocation2], 4
      %s18 = int_to_ptr.vmem [resolvable:$true] %s17
      %23 = dma.hbm_to_vmem [thread:$0]  %s0, 8192, %s18, [#allocation3], 4096, 4096, 256
    $region5: #{myreg_forward.1} parent=1 // pred_fallthru
      _
    // Predicated region
    $region6: #{myreg_forward.1} parent=1 // pred_check
      _
    $region7: #{myreg_forward.1} parent=1 // pred_check_branch
      %25 = sbr.rel (0) target = $region9
    $region8: #{myreg_forward.1} parent=1 // pred_region
      %s27 = ssub.s32 32768, 32768
      %28 = vsyncadd [#allocation5], %s27
      %s29 = sshll.u32 [#allocation4], 4
      %s30 = int_to_ptr.vmem [resolvable:$true] %s29
      %35 = dma.hbm_to_vmem [thread:$0]  %s1, 32768, %s30, [#allocation5], 64, 64, 4
    $region9: #{myreg_forward.1} parent=1 // pred_fallthru
      _
    // Predicated region
    $region10: #{myreg_forward.1} parent=1 // pred_check
      _
    $region11: #{myreg_forward.1} parent=1 // pred_check_branch
      %37 = sbr.rel (0) target = $region13
    $region12: #{myreg_forward.1} parent=1 // pred_region
      _
    $region13: #{myreg_forward.1} parent=1 // pred_fallthru
      _
    // Predicated region
    $region14: #{myreg_forward.1} parent=1 // pred_check
      _
    $region15: #{myreg_forward.1} parent=1 // pred_check_branch
      %39 = sbr.rel (0) target = $region17
    $region16: #{myreg_forward.1} parent=1 // pred_region
      _
    $region17: #{myreg_forward.1} parent=1 // pred_fallthru
      _
    // Predicated region
    $region18: #{myreg_forward.1} parent=1 // pred_check
      _
    $region19: #{myreg_forward.1} parent=1 // pred_check_branch
      %41 = sbr.rel (0) target = $region21
    $region20: #{myreg_forward.1} parent=1 // pred_region
      _
    $region21: #{myreg_forward.1} parent=1 // pred_fallthru
      _
    // Predicated region
    $region22: #{myreg_forward.1} parent=1 // pred_check
      _
    $region23: #{myreg_forward.1} parent=1 // pred_check_branch
      %43 = sbr.rel (0) target = $region25
    $region24: #{myreg_forward.1} parent=1 // pred_region
      %44 = dma.done [#allocation3], 8192
    $region25: #{myreg_forward.1} parent=1 // pred_fallthru
      _
    // Predicated region
    $region26: #{myreg_forward.1} parent=1 // pred_check
      _
    $region27: #{myreg_forward.1} parent=1 // pred_check_branch
      %46 = sbr.rel (0) target = $region29
    $region28: #{myreg_forward.1} parent=1 // pred_region
      %47 = dma.done [#allocation5], 32768
    $region29: #{myreg_forward.1} parent=1 // pred_fallthru
      _
    %v49 = vld [vmem:[#allocation2] sm:$0xff]
    %v50 = vld [vmem:[#allocation2 + $0x8] sm:$0xff]
    %v51 = vld [vmem:[#allocation2 + $0x10] sm:$0xff]
    %v52 = vld [vmem:[#allocation2 + $0x18] sm:$0xff]
    %v53 = vld [vmem:[#allocation2 + $0x20] sm:$0xff]
    %v54 = vld [vmem:[#allocation2 + $0x28] sm:$0xff]
    %v55 = vld [vmem:[#allocation2 + $0x30] sm:$0xff]
    %v56 = vld [vmem:[#allocation2 + $0x38] sm:$0xff]
    %v57 = vld [vmem:[#allocation2 + $0x40] sm:$0xff]
    %v58 = vld [vmem:[#allocation2 + $0x48] sm:$0xff]
    %v59 = vld [vmem:[#allocation2 + $0x50] sm:$0xff]
    %v60 = vld [vmem:[#allocation2 + $0x58] sm:$0xff]
    %v61 = vld [vmem:[#allocation2 + $0x60] sm:$0xff]
    %v62 = vld [vmem:[#allocation2 + $0x68] sm:$0xff]
    %v63 = vld [vmem:[#allocation2 + $0x70] sm:$0xff]
    %v64 = vld [vmem:[#allocation2 + $0x78] sm:$0xff]
    %v65 = vld [vmem:[#allocation2 + $0x80] sm:$0xff]
    %v66 = vld [vmem:[#allocation2 + $0x88] sm:$0xff]
    %v67 = vld [vmem:[#allocation2 + $0x90] sm:$0xff]
    %v68 = vld [vmem:[#allocation2 + $0x98] sm:$0xff]
    %v69 = vld [vmem:[#allocation2 + $0xa0] sm:$0xff]
    %v70 = vld [vmem:[#allocation2 + $0xa8] sm:$0xff]
    %v71 = vld [vmem:[#allocation2 + $0xb0] sm:$0xff]
    %v72 = vld [vmem:[#allocation2 + $0xb8] sm:$0xff]
    %v73 = vld [vmem:[#allocation2 + $0xc0] sm:$0xff]
    %v74 = vld [vmem:[#allocation2 + $0xc8] sm:$0xff]
    %v75 = vld [vmem:[#allocation2 + $0xd0] sm:$0xff]
    %v76 = vld [vmem:[#allocation2 + $0xd8] sm:$0xff]
    %v77 = vld [vmem:[#allocation2 + $0xe0] sm:$0xff]
    %v78 = vld [vmem:[#allocation2 + $0xe8] sm:$0xff]
    %v79 = vld [vmem:[#allocation2 + $0xf0] sm:$0xff]
    %v80 = vld [vmem:[#allocation2 + $0xf8] sm:$0xff]
    %v81 = vld [vmem:[#allocation2 + $0x100] sm:$0xff]
    %v82 = vld [vmem:[#allocation2 + $0x108] sm:$0xff]
    %v83 = vld [vmem:[#allocation2 + $0x110] sm:$0xff]
    %v84 = vld [vmem:[#allocation2 + $0x118] sm:$0xff]
    %v85 = vld [vmem:[#allocation2 + $0x120] sm:$0xff]
    %v86 = vld [vmem:[#allocation2 + $0x128] sm:$0xff]
    %v87 = vld [vmem:[#allocation2 + $0x130] sm:$0xff]
    %v88 = vld [vmem:[#allocation2 + $0x138] sm:$0xff]
    %v89 = vld [vmem:[#allocation2 + $0x140] sm:$0xff]
    %v90 = vld [vmem:[#allocation2 + $0x148] sm:$0xff]
    %v91 = vld [vmem:[#allocation2 + $0x150] sm:$0xff]
    %v92 = vld [vmem:[#allocation2 + $0x158] sm:$0xff]
    %v93 = vld [vmem:[#allocation2 + $0x160] sm:$0xff]
    %v94 = vld [vmem:[#allocation2 + $0x168] sm:$0xff]
    %v95 = vld [vmem:[#allocation2 + $0x170] sm:$0xff]
    %v96 = vld [vmem:[#allocation2 + $0x178] sm:$0xff]
    %v97 = vld [vmem:[#allocation2 + $0x180] sm:$0xff]
    %v98 = vld [vmem:[#allocation2 + $0x188] sm:$0xff]
    %v99 = vld [vmem:[#allocation2 + $0x190] sm:$0xff]
    %v100 = vld [vmem:[#allocation2 + $0x198] sm:$0xff]
    %v101 = vld [vmem:[#allocation2 + $0x1a0] sm:$0xff]
    %v102 = vld [vmem:[#allocation2 + $0x1a8] sm:$0xff]
    %v103 = vld [vmem:[#allocation2 + $0x1b0] sm:$0xff]
    %v104 = vld [vmem:[#allocation2 + $0x1b8] sm:$0xff]
    %v105 = vld [vmem:[#allocation2 + $0x1c0] sm:$0xff]
    %v106 = vld [vmem:[#allocation2 + $0x1c8] sm:$0xff]
    %v107 = vld [vmem:[#allocation2 + $0x1d0] sm:$0xff]
    %v108 = vld [vmem:[#allocation2 + $0x1d8] sm:$0xff]
    %v109 = vld [vmem:[#allocation2 + $0x1e0] sm:$0xff]
    %v110 = vld [vmem:[#allocation2 + $0x1e8] sm:$0xff]
    %v111 = vld [vmem:[#allocation2 + $0x1f0] sm:$0xff]
    %v112 = vld [vmem:[#allocation2 + $0x1f8] sm:$0xff]
    %v113 = vpack.c.bf16 %v81, %v49
    %v114 = vpack.c.bf16 %v82, %v50
    %v115 = vpack.c.bf16 %v83, %v51
    %v116 = vpack.c.bf16 %v84, %v52
    %v117 = vpack.c.bf16 %v85, %v53
    %v118 = vpack.c.bf16 %v86, %v54
    %v119 = vpack.c.bf16 %v87, %v55
    %v120 = vpack.c.bf16 %v88, %v56
    %v121 = vpack.c.bf16 %v89, %v57
    %v122 = vpack.c.bf16 %v90, %v58
    %v123 = vpack.c.bf16 %v91, %v59
    %v124 = vpack.c.bf16 %v92, %v60
    %v125 = vpack.c.bf16 %v93, %v61
    %v126 = vpack.c.bf16 %v94, %v62
    %v127 = vpack.c.bf16 %v95, %v63
    %v128 = vpack.c.bf16 %v96, %v64
    %v129 = vpack.c.bf16 %v97, %v65
    %v130 = vpack.c.bf16 %v98, %v66
    %v131 = vpack.c.bf16 %v99, %v67
    %v132 = vpack.c.bf16 %v100, %v68
    %v133 = vpack.c.bf16 %v101, %v69
    %v134 = vpack.c.bf16 %v102, %v70
    %v135 = vpack.c.bf16 %v103, %v71
    %v136 = vpack.c.bf16 %v104, %v72
    %v137 = vpack.c.bf16 %v105, %v73
    %v138 = vpack.c.bf16 %v106, %v74
    %v139 = vpack.c.bf16 %v107, %v75
    %v140 = vpack.c.bf16 %v108, %v76
    %v141 = vpack.c.bf16 %v109, %v77
    %v142 = vpack.c.bf16 %v110, %v78
    %v143 = vpack.c.bf16 %v111, %v79
    %v144 = vpack.c.bf16 %v112, %v80
    %v145 = vld [vmem:[#allocation4] sm:$0xf]
    %v146 = vld [vmem:[#allocation4 + $0x4] sm:$0xf]
    %v147 = vld [vmem:[#allocation4 + $0x8] sm:$0xf]
    %v148 = vld [vmem:[#allocation4 + $0xc] sm:$0xf]
    %v149 = vld [vmem:[#allocation4 + $0x10] sm:$0xf]
    %v150 = vld [vmem:[#allocation4 + $0x14] sm:$0xf]
    %v151 = vld [vmem:[#allocation4 + $0x18] sm:$0xf]
    %v152 = vld [vmem:[#allocation4 + $0x1c] sm:$0xf]
    %v153 = vld [vmem:[#allocation4 + $0x20] sm:$0xf]
    %v154 = vld [vmem:[#allocation4 + $0x24] sm:$0xf]
    %v155 = vld [vmem:[#allocation4 + $0x28] sm:$0xf]
    %v156 = vld [vmem:[#allocation4 + $0x2c] sm:$0xf]
    %v157 = vld [vmem:[#allocation4 + $0x30] sm:$0xf]
    %v158 = vld [vmem:[#allocation4 + $0x34] sm:$0xf]
    %v159 = vld [vmem:[#allocation4 + $0x38] sm:$0xf]
    %v160 = vld [vmem:[#allocation4 + $0x3c] sm:$0xf]
    %v161 = vld [vmem:[#allocation4 + $0x40] sm:$0xf]
    %v162 = vld [vmem:[#allocation4 + $0x44] sm:$0xf]
    %v163 = vld [vmem:[#allocation4 + $0x48] sm:$0xf]
    %v164 = vld [vmem:[#allocation4 + $0x4c] sm:$0xf]
    %v165 = vld [vmem:[#allocation4 + $0x50] sm:$0xf]
    %v166 = vld [vmem:[#allocation4 + $0x54] sm:$0xf]
    %v167 = vld [vmem:[#allocation4 + $0x58] sm:$0xf]
    %v168 = vld [vmem:[#allocation4 + $0x5c] sm:$0xf]
    %v169 = vld [vmem:[#allocation4 + $0x60] sm:$0xf]
    %v170 = vld [vmem:[#allocation4 + $0x64] sm:$0xf]
    %v171 = vld [vmem:[#allocation4 + $0x68] sm:$0xf]
    %v172 = vld [vmem:[#allocation4 + $0x6c] sm:$0xf]
    %v173 = vld [vmem:[#allocation4 + $0x70] sm:$0xf]
    %v174 = vld [vmem:[#allocation4 + $0x74] sm:$0xf]
    %v175 = vld [vmem:[#allocation4 + $0x78] sm:$0xf]
    %v176 = vld [vmem:[#allocation4 + $0x7c] sm:$0xf]
    %v177 = vld [vmem:[#allocation4 + $0x80] sm:$0xf]
    %v178 = vld [vmem:[#allocation4 + $0x84] sm:$0xf]
    %v179 = vld [vmem:[#allocation4 + $0x88] sm:$0xf]
    %v180 = vld [vmem:[#allocation4 + $0x8c] sm:$0xf]
    %v181 = vld [vmem:[#allocation4 + $0x90] sm:$0xf]
    %v182 = vld [vmem:[#allocation4 + $0x94] sm:$0xf]
    %v183 = vld [vmem:[#allocation4 + $0x98] sm:$0xf]
    %v184 = vld [vmem:[#allocation4 + $0x9c] sm:$0xf]
    %v185 = vld [vmem:[#allocation4 + $0xa0] sm:$0xf]
    %v186 = vld [vmem:[#allocation4 + $0xa4] sm:$0xf]
    %v187 = vld [vmem:[#allocation4 + $0xa8] sm:$0xf]
    %v188 = vld [vmem:[#allocation4 + $0xac] sm:$0xf]
    %v189 = vld [vmem:[#allocation4 + $0xb0] sm:$0xf]
    %v190 = vld [vmem:[#allocation4 + $0xb4] sm:$0xf]
    %v191 = vld [vmem:[#allocation4 + $0xb8] sm:$0xf]
    %v192 = vld [vmem:[#allocation4 + $0xbc] sm:$0xf]
    %v193 = vld [vmem:[#allocation4 + $0xc0] sm:$0xf]
    %v194 = vld [vmem:[#allocation4 + $0xc4] sm:$0xf]
    %v195 = vld [vmem:[#allocation4 + $0xc8] sm:$0xf]
    %v196 = vld [vmem:[#allocation4 + $0xcc] sm:$0xf]
    %v197 = vld [vmem:[#allocation4 + $0xd0] sm:$0xf]
    %v198 = vld [vmem:[#allocation4 + $0xd4] sm:$0xf]
    %v199 = vld [vmem:[#allocation4 + $0xd8] sm:$0xf]
    %v200 = vld [vmem:[#allocation4 + $0xdc] sm:$0xf]
    %v201 = vld [vmem:[#allocation4 + $0xe0] sm:$0xf]
    %v202 = vld [vmem:[#allocation4 + $0xe4] sm:$0xf]
    %v203 = vld [vmem:[#allocation4 + $0xe8] sm:$0xf]
    %v204 = vld [vmem:[#allocation4 + $0xec] sm:$0xf]
    %v205 = vld [vmem:[#allocation4 + $0xf0] sm:$0xf]
    %v206 = vld [vmem:[#allocation4 + $0xf4] sm:$0xf]
    %v207 = vld [vmem:[#allocation4 + $0xf8] sm:$0xf]
    %v208 = vld [vmem:[#allocation4 + $0xfc] sm:$0xf]
    %v209 = vld [vmem:[#allocation4 + $0x100] sm:$0xf]
    %v210 = vld [vmem:[#allocation4 + $0x104] sm:$0xf]
    %v211 = vld [vmem:[#allocation4 + $0x108] sm:$0xf]
    %v212 = vld [vmem:[#allocation4 + $0x10c] sm:$0xf]
    %v213 = vld [vmem:[#allocation4 + $0x110] sm:$0xf]
    %v214 = vld [vmem:[#allocation4 + $0x114] sm:$0xf]
    %v215 = vld [vmem:[#allocation4 + $0x118] sm:$0xf]
    %v216 = vld [vmem:[#allocation4 + $0x11c] sm:$0xf]
    %v217 = vld [vmem:[#allocation4 + $0x120] sm:$0xf]
    %v218 = vld [vmem:[#allocation4 + $0x124] sm:$0xf]
    %v219 = vld [vmem:[#allocation4 + $0x128] sm:$0xf]
    %v220 = vld [vmem:[#allocation4 + $0x12c] sm:$0xf]
    %v221 = vld [vmem:[#allocation4 + $0x130] sm:$0xf]
    %v222 = vld [vmem:[#allocation4 + $0x134] sm:$0xf]
    %v223 = vld [vmem:[#allocation4 + $0x138] sm:$0xf]
    %v224 = vld [vmem:[#allocation4 + $0x13c] sm:$0xf]
    %v225 = vld [vmem:[#allocation4 + $0x140] sm:$0xf]
    %v226 = vld [vmem:[#allocation4 + $0x144] sm:$0xf]
    %v227 = vld [vmem:[#allocation4 + $0x148] sm:$0xf]
    %v228 = vld [vmem:[#allocation4 + $0x14c] sm:$0xf]
    %v229 = vld [vmem:[#allocation4 + $0x150] sm:$0xf]
    %v230 = vld [vmem:[#allocation4 + $0x154] sm:$0xf]
    %v231 = vld [vmem:[#allocation4 + $0x158] sm:$0xf]
    %v232 = vld [vmem:[#allocation4 + $0x15c] sm:$0xf]
    %v233 = vld [vmem:[#allocation4 + $0x160] sm:$0xf]
    %v234 = vld [vmem:[#allocation4 + $0x164] sm:$0xf]
    %v235 = vld [vmem:[#allocation4 + $0x168] sm:$0xf]
    %v236 = vld [vmem:[#allocation4 + $0x16c] sm:$0xf]
    %v237 = vld [vmem:[#allocation4 + $0x170] sm:$0xf]
    %v238 = vld [vmem:[#allocation4 + $0x174] sm:$0xf]
    %v239 = vld [vmem:[#allocation4 + $0x178] sm:$0xf]
    %v240 = vld [vmem:[#allocation4 + $0x17c] sm:$0xf]
    %v241 = vld [vmem:[#allocation4 + $0x180] sm:$0xf]
    %v242 = vld [vmem:[#allocation4 + $0x184] sm:$0xf]
    %v243 = vld [vmem:[#allocation4 + $0x188] sm:$0xf]
    %v244 = vld [vmem:[#allocation4 + $0x18c] sm:$0xf]
    %v245 = vld [vmem:[#allocation4 + $0x190] sm:$0xf]
    %v246 = vld [vmem:[#allocation4 + $0x194] sm:$0xf]
    %v247 = vld [vmem:[#allocation4 + $0x198] sm:$0xf]
    %v248 = vld [vmem:[#allocation4 + $0x19c] sm:$0xf]
    %v249 = vld [vmem:[#allocation4 + $0x1a0] sm:$0xf]
    %v250 = vld [vmem:[#allocation4 + $0x1a4] sm:$0xf]
    %v251 = vld [vmem:[#allocation4 + $0x1a8] sm:$0xf]
    %v252 = vld [vmem:[#allocation4 + $0x1ac] sm:$0xf]
    %v253 = vld [vmem:[#allocation4 + $0x1b0] sm:$0xf]
    %v254 = vld [vmem:[#allocation4 + $0x1b4] sm:$0xf]
    %v255 = vld [vmem:[#allocation4 + $0x1b8] sm:$0xf]
    %v256 = vld [vmem:[#allocation4 + $0x1bc] sm:$0xf]
    %v257 = vld [vmem:[#allocation4 + $0x1c0] sm:$0xf]
    %v258 = vld [vmem:[#allocation4 + $0x1c4] sm:$0xf]
    %v259 = vld [vmem:[#allocation4 + $0x1c8] sm:$0xf]
    %v260 = vld [vmem:[#allocation4 + $0x1cc] sm:$0xf]
    %v261 = vld [vmem:[#allocation4 + $0x1d0] sm:$0xf]
    %v262 = vld [vmem:[#allocation4 + $0x1d4] sm:$0xf]
    %v263 = vld [vmem:[#allocation4 + $0x1d8] sm:$0xf]
    %v264 = vld [vmem:[#allocation4 + $0x1dc] sm:$0xf]
    %v265 = vld [vmem:[#allocation4 + $0x1e0] sm:$0xf]
    %v266 = vld [vmem:[#allocation4 + $0x1e4] sm:$0xf]
    %v267 = vld [vmem:[#allocation4 + $0x1e8] sm:$0xf]
    %v268 = vld [vmem:[#allocation4 + $0x1ec] sm:$0xf]
    %v269 = vld [vmem:[#allocation4 + $0x1f0] sm:$0xf]
    %v270 = vld [vmem:[#allocation4 + $0x1f4] sm:$0xf]
    %v271 = vld [vmem:[#allocation4 + $0x1f8] sm:$0xf]
    %v272 = vld [vmem:[#allocation4 + $0x1fc] sm:$0xf]
    %v273 = vld [vmem:[#allocation4 + $0x200] sm:$0xf]
    %v274 = vld [vmem:[#allocation4 + $0x204] sm:$0xf]
    %v275 = vld [vmem:[#allocation4 + $0x208] sm:$0xf]
    %v276 = vld [vmem:[#allocation4 + $0x20c] sm:$0xf]
    %v277 = vld [vmem:[#allocation4 + $0x210] sm:$0xf]
    %v278 = vld [vmem:[#allocation4 + $0x214] sm:$0xf]
    %v279 = vld [vmem:[#allocation4 + $0x218] sm:$0xf]
    %v280 = vld [vmem:[#allocation4 + $0x21c] sm:$0xf]
    %v281 = vld [vmem:[#allocation4 + $0x220] sm:$0xf]
    %v282 = vld [vmem:[#allocation4 + $0x224] sm:$0xf]
    %v283 = vld [vmem:[#allocation4 + $0x228] sm:$0xf]
    %v284 = vld [vmem:[#allocation4 + $0x22c] sm:$0xf]
    %v285 = vld [vmem:[#allocation4 + $0x230] sm:$0xf]
    %v286 = vld [vmem:[#allocation4 + $0x234] sm:$0xf]
    %v287 = vld [vmem:[#allocation4 + $0x238] sm:$0xf]
    %v288 = vld [vmem:[#allocation4 + $0x23c] sm:$0xf]
    %v289 = vld [vmem:[#allocation4 + $0x240] sm:$0xf]
    %v290 = vld [vmem:[#allocation4 + $0x244] sm:$0xf]
    %v291 = vld [vmem:[#allocation4 + $0x248] sm:$0xf]
    %v292 = vld [vmem:[#allocation4 + $0x24c] sm:$0xf]
    %v293 = vld [vmem:[#allocation4 + $0x250] sm:$0xf]
    %v294 = vld [vmem:[#allocation4 + $0x254] sm:$0xf]
    %v295 = vld [vmem:[#allocation4 + $0x258] sm:$0xf]
    %v296 = vld [vmem:[#allocation4 + $0x25c] sm:$0xf]
    %v297 = vld [vmem:[#allocation4 + $0x260] sm:$0xf]
    %v298 = vld [vmem:[#allocation4 + $0x264] sm:$0xf]
    %v299 = vld [vmem:[#allocation4 + $0x268] sm:$0xf]
    %v300 = vld [vmem:[#allocation4 + $0x26c] sm:$0xf]
    %v301 = vld [vmem:[#allocation4 + $0x270] sm:$0xf]
    %v302 = vld [vmem:[#allocation4 + $0x274] sm:$0xf]
    %v303 = vld [vmem:[#allocation4 + $0x278] sm:$0xf]
    %v304 = vld [vmem:[#allocation4 + $0x27c] sm:$0xf]
    %v305 = vld [vmem:[#allocation4 + $0x280] sm:$0xf]
    %v306 = vld [vmem:[#allocation4 + $0x284] sm:$0xf]
    %v307 = vld [vmem:[#allocation4 + $0x288] sm:$0xf]
    %v308 = vld [vmem:[#allocation4 + $0x28c] sm:$0xf]
    %v309 = vld [vmem:[#allocation4 + $0x290] sm:$0xf]
    %v310 = vld [vmem:[#allocation4 + $0x294] sm:$0xf]
    %v311 = vld [vmem:[#allocation4 + $0x298] sm:$0xf]
    %v312 = vld [vmem:[#allocation4 + $0x29c] sm:$0xf]
    %v313 = vld [vmem:[#allocation4 + $0x2a0] sm:$0xf]
    %v314 = vld [vmem:[#allocation4 + $0x2a4] sm:$0xf]
    %v315 = vld [vmem:[#allocation4 + $0x2a8] sm:$0xf]
    %v316 = vld [vmem:[#allocation4 + $0x2ac] sm:$0xf]
    %v317 = vld [vmem:[#allocation4 + $0x2b0] sm:$0xf]
    %v318 = vld [vmem:[#allocation4 + $0x2b4] sm:$0xf]
    %v319 = vld [vmem:[#allocation4 + $0x2b8] sm:$0xf]
    %v320 = vld [vmem:[#allocation4 + $0x2bc] sm:$0xf]
    %v321 = vld [vmem:[#allocation4 + $0x2c0] sm:$0xf]
    %v322 = vld [vmem:[#allocation4 + $0x2c4] sm:$0xf]
    %v323 = vld [vmem:[#allocation4 + $0x2c8] sm:$0xf]
    %v324 = vld [vmem:[#allocation4 + $0x2cc] sm:$0xf]
    %v325 = vld [vmem:[#allocation4 + $0x2d0] sm:$0xf]
    %v326 = vld [vmem:[#allocation4 + $0x2d4] sm:$0xf]
    %v327 = vld [vmem:[#allocation4 + $0x2d8] sm:$0xf]
    %v328 = vld [vmem:[#allocation4 + $0x2dc] sm:$0xf]
    %v329 = vld [vmem:[#allocation4 + $0x2e0] sm:$0xf]
    %v330 = vld [vmem:[#allocation4 + $0x2e4] sm:$0xf]
    %v331 = vld [vmem:[#allocation4 + $0x2e8] sm:$0xf]
    %v332 = vld [vmem:[#allocation4 + $0x2ec] sm:$0xf]
    %v333 = vld [vmem:[#allocation4 + $0x2f0] sm:$0xf]
    %v334 = vld [vmem:[#allocation4 + $0x2f4] sm:$0xf]
    %v335 = vld [vmem:[#allocation4 + $0x2f8] sm:$0xf]
    %v336 = vld [vmem:[#allocation4 + $0x2fc] sm:$0xf]
    %v337 = vld [vmem:[#allocation4 + $0x300] sm:$0xf]
    %v338 = vld [vmem:[#allocation4 + $0x304] sm:$0xf]
    %v339 = vld [vmem:[#allocation4 + $0x308] sm:$0xf]
    %v340 = vld [vmem:[#allocation4 + $0x30c] sm:$0xf]
    %v341 = vld [vmem:[#allocation4 + $0x310] sm:$0xf]
    %v342 = vld [vmem:[#allocation4 + $0x314] sm:$0xf]
    %v343 = vld [vmem:[#allocation4 + $0x318] sm:$0xf]
    %v344 = vld [vmem:[#allocation4 + $0x31c] sm:$0xf]
    %v345 = vld [vmem:[#allocation4 + $0x320] sm:$0xf]
    %v346 = vld [vmem:[#allocation4 + $0x324] sm:$0xf]
    %v347 = vld [vmem:[#allocation4 + $0x328] sm:$0xf]
    %v348 = vld [vmem:[#allocation4 + $0x32c] sm:$0xf]
    %v349 = vld [vmem:[#allocation4 + $0x330] sm:$0xf]
    %v350 = vld [vmem:[#allocation4 + $0x334] sm:$0xf]
    %v351 = vld [vmem:[#allocation4 + $0x338] sm:$0xf]
    %v352 = vld [vmem:[#allocation4 + $0x33c] sm:$0xf]
    %v353 = vld [vmem:[#allocation4 + $0x340] sm:$0xf]
    %v354 = vld [vmem:[#allocation4 + $0x344] sm:$0xf]
    %v355 = vld [vmem:[#allocation4 + $0x348] sm:$0xf]
    %v356 = vld [vmem:[#allocation4 + $0x34c] sm:$0xf]
    %v357 = vld [vmem:[#allocation4 + $0x350] sm:$0xf]
    %v358 = vld [vmem:[#allocation4 + $0x354] sm:$0xf]
    %v359 = vld [vmem:[#allocation4 + $0x358] sm:$0xf]
    %v360 = vld [vmem:[#allocation4 + $0x35c] sm:$0xf]
    %v361 = vld [vmem:[#allocation4 + $0x360] sm:$0xf]
    %v362 = vld [vmem:[#allocation4 + $0x364] sm:$0xf]
    %v363 = vld [vmem:[#allocation4 + $0x368] sm:$0xf]
    %v364 = vld [vmem:[#allocation4 + $0x36c] sm:$0xf]
    %v365 = vld [vmem:[#allocation4 + $0x370] sm:$0xf]
    %v366 = vld [vmem:[#allocation4 + $0x374] sm:$0xf]
    %v367 = vld [vmem:[#allocation4 + $0x378] sm:$0xf]
    %v368 = vld [vmem:[#allocation4 + $0x37c] sm:$0xf]
    %v369 = vld [vmem:[#allocation4 + $0x380] sm:$0xf]
    %v370 = vld [vmem:[#allocation4 + $0x384] sm:$0xf]
    %v371 = vld [vmem:[#allocation4 + $0x388] sm:$0xf]
    %v372 = vld [vmem:[#allocation4 + $0x38c] sm:$0xf]
    %v373 = vld [vmem:[#allocation4 + $0x390] sm:$0xf]
    %v374 = vld [vmem:[#allocation4 + $0x394] sm:$0xf]
    %v375 = vld [vmem:[#allocation4 + $0x398] sm:$0xf]
    %v376 = vld [vmem:[#allocation4 + $0x39c] sm:$0xf]
    %v377 = vld [vmem:[#allocation4 + $0x3a0] sm:$0xf]
    %v378 = vld [vmem:[#allocation4 + $0x3a4] sm:$0xf]
    %v379 = vld [vmem:[#allocation4 + $0x3a8] sm:$0xf]
    %v380 = vld [vmem:[#allocation4 + $0x3ac] sm:$0xf]
    %v381 = vld [vmem:[#allocation4 + $0x3b0] sm:$0xf]
    %v382 = vld [vmem:[#allocation4 + $0x3b4] sm:$0xf]
    %v383 = vld [vmem:[#allocation4 + $0x3b8] sm:$0xf]
    %v384 = vld [vmem:[#allocation4 + $0x3bc] sm:$0xf]
    %v385 = vld [vmem:[#allocation4 + $0x3c0] sm:$0xf]
    %v386 = vld [vmem:[#allocation4 + $0x3c4] sm:$0xf]
    %v387 = vld [vmem:[#allocation4 + $0x3c8] sm:$0xf]
    %v388 = vld [vmem:[#allocation4 + $0x3cc] sm:$0xf]
    %v389 = vld [vmem:[#allocation4 + $0x3d0] sm:$0xf]
    %v390 = vld [vmem:[#allocation4 + $0x3d4] sm:$0xf]
    %v391 = vld [vmem:[#allocation4 + $0x3d8] sm:$0xf]
    %v392 = vld [vmem:[#allocation4 + $0x3dc] sm:$0xf]
    %v393 = vld [vmem:[#allocation4 + $0x3e0] sm:$0xf]
    %v394 = vld [vmem:[#allocation4 + $0x3e4] sm:$0xf]
    %v395 = vld [vmem:[#allocation4 + $0x3e8] sm:$0xf]
    %v396 = vld [vmem:[#allocation4 + $0x3ec] sm:$0xf]
    %v397 = vld [vmem:[#allocation4 + $0x3f0] sm:$0xf]
    %v398 = vld [vmem:[#allocation4 + $0x3f4] sm:$0xf]
    %v399 = vld [vmem:[#allocation4 + $0x3f8] sm:$0xf]
    %v400 = vld [vmem:[#allocation4 + $0x3fc] sm:$0xf]
    %v401 = vld [vmem:[#allocation4 + $0x400] sm:$0xf]
    %v402 = vld [vmem:[#allocation4 + $0x404] sm:$0xf]
    %v403 = vld [vmem:[#allocation4 + $0x408] sm:$0xf]
    %v404 = vld [vmem:[#allocation4 + $0x40c] sm:$0xf]
    %v405 = vld [vmem:[#allocation4 + $0x410] sm:$0xf]
    %v406 = vld [vmem:[#allocation4 + $0x414] sm:$0xf]
    %v407 = vld [vmem:[#allocation4 + $0x418] sm:$0xf]
    %v408 = vld [vmem:[#allocation4 + $0x41c] sm:$0xf]
    %v409 = vld [vmem:[#allocation4 + $0x420] sm:$0xf]
    %v410 = vld [vmem:[#allocation4 + $0x424] sm:$0xf]
    %v411 = vld [vmem:[#allocation4 + $0x428] sm:$0xf]
    %v412 = vld [vmem:[#allocation4 + $0x42c] sm:$0xf]
    %v413 = vld [vmem:[#allocation4 + $0x430] sm:$0xf]
    %v414 = vld [vmem:[#allocation4 + $0x434] sm:$0xf]
    %v415 = vld [vmem:[#allocation4 + $0x438] sm:$0xf]
    %v416 = vld [vmem:[#allocation4 + $0x43c] sm:$0xf]
    %v417 = vld [vmem:[#allocation4 + $0x440] sm:$0xf]
    %v418 = vld [vmem:[#allocation4 + $0x444] sm:$0xf]
    %v419 = vld [vmem:[#allocation4 + $0x448] sm:$0xf]
    %v420 = vld [vmem:[#allocation4 + $0x44c] sm:$0xf]
    %v421 = vld [vmem:[#allocation4 + $0x450] sm:$0xf]
    %v422 = vld [vmem:[#allocation4 + $0x454] sm:$0xf]
    %v423 = vld [vmem:[#allocation4 + $0x458] sm:$0xf]
    %v424 = vld [vmem:[#allocation4 + $0x45c] sm:$0xf]
    %v425 = vld [vmem:[#allocation4 + $0x460] sm:$0xf]
    %v426 = vld [vmem:[#allocation4 + $0x464] sm:$0xf]
    %v427 = vld [vmem:[#allocation4 + $0x468] sm:$0xf]
    %v428 = vld [vmem:[#allocation4 + $0x46c] sm:$0xf]
    %v429 = vld [vmem:[#allocation4 + $0x470] sm:$0xf]
    %v430 = vld [vmem:[#allocation4 + $0x474] sm:$0xf]
    %v431 = vld [vmem:[#allocation4 + $0x478] sm:$0xf]
    %v432 = vld [vmem:[#allocation4 + $0x47c] sm:$0xf]
    %v433 = vld [vmem:[#allocation4 + $0x480] sm:$0xf]
    %v434 = vld [vmem:[#allocation4 + $0x484] sm:$0xf]
    %v435 = vld [vmem:[#allocation4 + $0x488] sm:$0xf]
    %v436 = vld [vmem:[#allocation4 + $0x48c] sm:$0xf]
    %v437 = vld [vmem:[#allocation4 + $0x490] sm:$0xf]
    %v438 = vld [vmem:[#allocation4 + $0x494] sm:$0xf]
    %v439 = vld [vmem:[#allocation4 + $0x498] sm:$0xf]
    %v440 = vld [vmem:[#allocation4 + $0x49c] sm:$0xf]
    %v441 = vld [vmem:[#allocation4 + $0x4a0] sm:$0xf]
    %v442 = vld [vmem:[#allocation4 + $0x4a4] sm:$0xf]
    %v443 = vld [vmem:[#allocation4 + $0x4a8] sm:$0xf]
    %v444 = vld [vmem:[#allocation4 + $0x4ac] sm:$0xf]
    %v445 = vld [vmem:[#allocation4 + $0x4b0] sm:$0xf]
    %v446 = vld [vmem:[#allocation4 + $0x4b4] sm:$0xf]
    %v447 = vld [vmem:[#allocation4 + $0x4b8] sm:$0xf]
    %v448 = vld [vmem:[#allocation4 + $0x4bc] sm:$0xf]
    %v449 = vld [vmem:[#allocation4 + $0x4c0] sm:$0xf]
    %v450 = vld [vmem:[#allocation4 + $0x4c4] sm:$0xf]
    %v451 = vld [vmem:[#allocation4 + $0x4c8] sm:$0xf]
    %v452 = vld [vmem:[#allocation4 + $0x4cc] sm:$0xf]
    %v453 = vld [vmem:[#allocation4 + $0x4d0] sm:$0xf]
    %v454 = vld [vmem:[#allocation4 + $0x4d4] sm:$0xf]
    %v455 = vld [vmem:[#allocation4 + $0x4d8] sm:$0xf]
    %v456 = vld [vmem:[#allocation4 + $0x4dc] sm:$0xf]
    %v457 = vld [vmem:[#allocation4 + $0x4e0] sm:$0xf]
    %v458 = vld [vmem:[#allocation4 + $0x4e4] sm:$0xf]
    %v459 = vld [vmem:[#allocation4 + $0x4e8] sm:$0xf]
    %v460 = vld [vmem:[#allocation4 + $0x4ec] sm:$0xf]
    %v461 = vld [vmem:[#allocation4 + $0x4f0] sm:$0xf]
    %v462 = vld [vmem:[#allocation4 + $0x4f4] sm:$0xf]
    %v463 = vld [vmem:[#allocation4 + $0x4f8] sm:$0xf]
    %v464 = vld [vmem:[#allocation4 + $0x4fc] sm:$0xf]
    %v465 = vld [vmem:[#allocation4 + $0x500] sm:$0xf]
    %v466 = vld [vmem:[#allocation4 + $0x504] sm:$0xf]
    %v467 = vld [vmem:[#allocation4 + $0x508] sm:$0xf]
    %v468 = vld [vmem:[#allocation4 + $0x50c] sm:$0xf]
    %v469 = vld [vmem:[#allocation4 + $0x510] sm:$0xf]
    %v470 = vld [vmem:[#allocation4 + $0x514] sm:$0xf]
    %v471 = vld [vmem:[#allocation4 + $0x518] sm:$0xf]
    %v472 = vld [vmem:[#allocation4 + $0x51c] sm:$0xf]
    %v473 = vld [vmem:[#allocation4 + $0x520] sm:$0xf]
    %v474 = vld [vmem:[#allocation4 + $0x524] sm:$0xf]
    %v475 = vld [vmem:[#allocation4 + $0x528] sm:$0xf]
    %v476 = vld [vmem:[#allocation4 + $0x52c] sm:$0xf]
    %v477 = vld [vmem:[#allocation4 + $0x530] sm:$0xf]
    %v478 = vld [vmem:[#allocation4 + $0x534] sm:$0xf]
    %v479 = vld [vmem:[#allocation4 + $0x538] sm:$0xf]
    %v480 = vld [vmem:[#allocation4 + $0x53c] sm:$0xf]
    %v481 = vld [vmem:[#allocation4 + $0x540] sm:$0xf]
    %v482 = vld [vmem:[#allocation4 + $0x544] sm:$0xf]
    %v483 = vld [vmem:[#allocation4 + $0x548] sm:$0xf]
    %v484 = vld [vmem:[#allocation4 + $0x54c] sm:$0xf]
    %v485 = vld [vmem:[#allocation4 + $0x550] sm:$0xf]
    %v486 = vld [vmem:[#allocation4 + $0x554] sm:$0xf]
    %v487 = vld [vmem:[#allocation4 + $0x558] sm:$0xf]
    %v488 = vld [vmem:[#allocation4 + $0x55c] sm:$0xf]
    %v489 = vld [vmem:[#allocation4 + $0x560] sm:$0xf]
    %v490 = vld [vmem:[#allocation4 + $0x564] sm:$0xf]
    %v491 = vld [vmem:[#allocation4 + $0x568] sm:$0xf]
    %v492 = vld [vmem:[#allocation4 + $0x56c] sm:$0xf]
    %v493 = vld [vmem:[#allocation4 + $0x570] sm:$0xf]
    %v494 = vld [vmem:[#allocation4 + $0x574] sm:$0xf]
    %v495 = vld [vmem:[#allocation4 + $0x578] sm:$0xf]
    %v496 = vld [vmem:[#allocation4 + $0x57c] sm:$0xf]
    %v497 = vld [vmem:[#allocation4 + $0x580] sm:$0xf]
    %v498 = vld [vmem:[#allocation4 + $0x584] sm:$0xf]
    %v499 = vld [vmem:[#allocation4 + $0x588] sm:$0xf]
    %v500 = vld [vmem:[#allocation4 + $0x58c] sm:$0xf]
    %v501 = vld [vmem:[#allocation4 + $0x590] sm:$0xf]
    %v502 = vld [vmem:[#allocation4 + $0x594] sm:$0xf]
    %v503 = vld [vmem:[#allocation4 + $0x598] sm:$0xf]
    %v504 = vld [vmem:[#allocation4 + $0x59c] sm:$0xf]
    %v505 = vld [vmem:[#allocation4 + $0x5a0] sm:$0xf]
    %v506 = vld [vmem:[#allocation4 + $0x5a4] sm:$0xf]
    %v507 = vld [vmem:[#allocation4 + $0x5a8] sm:$0xf]
    %v508 = vld [vmem:[#allocation4 + $0x5ac] sm:$0xf]
    %v509 = vld [vmem:[#allocation4 + $0x5b0] sm:$0xf]
    %v510 = vld [vmem:[#allocation4 + $0x5b4] sm:$0xf]
    %v511 = vld [vmem:[#allocation4 + $0x5b8] sm:$0xf]
    %v512 = vld [vmem:[#allocation4 + $0x5bc] sm:$0xf]
    %v513 = vld [vmem:[#allocation4 + $0x5c0] sm:$0xf]
    %v514 = vld [vmem:[#allocation4 + $0x5c4] sm:$0xf]
    %v515 = vld [vmem:[#allocation4 + $0x5c8] sm:$0xf]
    %v516 = vld [vmem:[#allocation4 + $0x5cc] sm:$0xf]
    %v517 = vld [vmem:[#allocation4 + $0x5d0] sm:$0xf]
    %v518 = vld [vmem:[#allocation4 + $0x5d4] sm:$0xf]
    %v519 = vld [vmem:[#allocation4 + $0x5d8] sm:$0xf]
    %v520 = vld [vmem:[#allocation4 + $0x5dc] sm:$0xf]
    %v521 = vld [vmem:[#allocation4 + $0x5e0] sm:$0xf]
    %v522 = vld [vmem:[#allocation4 + $0x5e4] sm:$0xf]
    %v523 = vld [vmem:[#allocation4 + $0x5e8] sm:$0xf]
    %v524 = vld [vmem:[#allocation4 + $0x5ec] sm:$0xf]
    %v525 = vld [vmem:[#allocation4 + $0x5f0] sm:$0xf]
    %v526 = vld [vmem:[#allocation4 + $0x5f4] sm:$0xf]
    %v527 = vld [vmem:[#allocation4 + $0x5f8] sm:$0xf]
    %v528 = vld [vmem:[#allocation4 + $0x5fc] sm:$0xf]
    %v529 = vld [vmem:[#allocation4 + $0x600] sm:$0xf]
    %v530 = vld [vmem:[#allocation4 + $0x604] sm:$0xf]
    %v531 = vld [vmem:[#allocation4 + $0x608] sm:$0xf]
    %v532 = vld [vmem:[#allocation4 + $0x60c] sm:$0xf]
    %v533 = vld [vmem:[#allocation4 + $0x610] sm:$0xf]
    %v534 = vld [vmem:[#allocation4 + $0x614] sm:$0xf]
    %v535 = vld [vmem:[#allocation4 + $0x618] sm:$0xf]
    %v536 = vld [vmem:[#allocation4 + $0x61c] sm:$0xf]
    %v537 = vld [vmem:[#allocation4 + $0x620] sm:$0xf]
    %v538 = vld [vmem:[#allocation4 + $0x624] sm:$0xf]
    %v539 = vld [vmem:[#allocation4 + $0x628] sm:$0xf]
    %v540 = vld [vmem:[#allocation4 + $0x62c] sm:$0xf]
    %v541 = vld [vmem:[#allocation4 + $0x630] sm:$0xf]
    %v542 = vld [vmem:[#allocation4 + $0x634] sm:$0xf]
    %v543 = vld [vmem:[#allocation4 + $0x638] sm:$0xf]
    %v544 = vld [vmem:[#allocation4 + $0x63c] sm:$0xf]
    %v545 = vld [vmem:[#allocation4 + $0x640] sm:$0xf]
    %v546 = vld [vmem:[#allocation4 + $0x644] sm:$0xf]
    %v547 = vld [vmem:[#allocation4 + $0x648] sm:$0xf]
    %v548 = vld [vmem:[#allocation4 + $0x64c] sm:$0xf]
    %v549 = vld [vmem:[#allocation4 + $0x650] sm:$0xf]
    %v550 = vld [vmem:[#allocation4 + $0x654] sm:$0xf]
    %v551 = vld [vmem:[#allocation4 + $0x658] sm:$0xf]
    %v552 = vld [vmem:[#allocation4 + $0x65c] sm:$0xf]
    %v553 = vld [vmem:[#allocation4 + $0x660] sm:$0xf]
    %v554 = vld [vmem:[#allocation4 + $0x664] sm:$0xf]
    %v555 = vld [vmem:[#allocation4 + $0x668] sm:$0xf]
    %v556 = vld [vmem:[#allocation4 + $0x66c] sm:$0xf]
    %v557 = vld [vmem:[#allocation4 + $0x670] sm:$0xf]
    %v558 = vld [vmem:[#allocation4 + $0x674] sm:$0xf]
    %v559 = vld [vmem:[#allocation4 + $0x678] sm:$0xf]
    %v560 = vld [vmem:[#allocation4 + $0x67c] sm:$0xf]
    %v561 = vld [vmem:[#allocation4 + $0x680] sm:$0xf]
    %v562 = vld [vmem:[#allocation4 + $0x684] sm:$0xf]
    %v563 = vld [vmem:[#allocation4 + $0x688] sm:$0xf]
    %v564 = vld [vmem:[#allocation4 + $0x68c] sm:$0xf]
    %v565 = vld [vmem:[#allocation4 + $0x690] sm:$0xf]
    %v566 = vld [vmem:[#allocation4 + $0x694] sm:$0xf]
    %v567 = vld [vmem:[#allocation4 + $0x698] sm:$0xf]
    %v568 = vld [vmem:[#allocation4 + $0x69c] sm:$0xf]
    %v569 = vld [vmem:[#allocation4 + $0x6a0] sm:$0xf]
    %v570 = vld [vmem:[#allocation4 + $0x6a4] sm:$0xf]
    %v571 = vld [vmem:[#allocation4 + $0x6a8] sm:$0xf]
    %v572 = vld [vmem:[#allocation4 + $0x6ac] sm:$0xf]
    %v573 = vld [vmem:[#allocation4 + $0x6b0] sm:$0xf]
    %v574 = vld [vmem:[#allocation4 + $0x6b4] sm:$0xf]
    %v575 = vld [vmem:[#allocation4 + $0x6b8] sm:$0xf]
    %v576 = vld [vmem:[#allocation4 + $0x6bc] sm:$0xf]
    %v577 = vld [vmem:[#allocation4 + $0x6c0] sm:$0xf]
    %v578 = vld [vmem:[#allocation4 + $0x6c4] sm:$0xf]
    %v579 = vld [vmem:[#allocation4 + $0x6c8] sm:$0xf]
    %v580 = vld [vmem:[#allocation4 + $0x6cc] sm:$0xf]
    %v581 = vld [vmem:[#allocation4 + $0x6d0] sm:$0xf]
    %v582 = vld [vmem:[#allocation4 + $0x6d4] sm:$0xf]
    %v583 = vld [vmem:[#allocation4 + $0x6d8] sm:$0xf]
    %v584 = vld [vmem:[#allocation4 + $0x6dc] sm:$0xf]
    %v585 = vld [vmem:[#allocation4 + $0x6e0] sm:$0xf]
    %v586 = vld [vmem:[#allocation4 + $0x6e4] sm:$0xf]
    %v587 = vld [vmem:[#allocation4 + $0x6e8] sm:$0xf]
    %v588 = vld [vmem:[#allocation4 + $0x6ec] sm:$0xf]
    %v589 = vld [vmem:[#allocation4 + $0x6f0] sm:$0xf]
    %v590 = vld [vmem:[#allocation4 + $0x6f4] sm:$0xf]
    %v591 = vld [vmem:[#allocation4 + $0x6f8] sm:$0xf]
    %v592 = vld [vmem:[#allocation4 + $0x6fc] sm:$0xf]
    %v593 = vld [vmem:[#allocation4 + $0x700] sm:$0xf]
    %v594 = vld [vmem:[#allocation4 + $0x704] sm:$0xf]
    %v595 = vld [vmem:[#allocation4 + $0x708] sm:$0xf]
    %v596 = vld [vmem:[#allocation4 + $0x70c] sm:$0xf]
    %v597 = vld [vmem:[#allocation4 + $0x710] sm:$0xf]
    %v598 = vld [vmem:[#allocation4 + $0x714] sm:$0xf]
    %v599 = vld [vmem:[#allocation4 + $0x718] sm:$0xf]
    %v600 = vld [vmem:[#allocation4 + $0x71c] sm:$0xf]
    %v601 = vld [vmem:[#allocation4 + $0x720] sm:$0xf]
    %v602 = vld [vmem:[#allocation4 + $0x724] sm:$0xf]
    %v603 = vld [vmem:[#allocation4 + $0x728] sm:$0xf]
    %v604 = vld [vmem:[#allocation4 + $0x72c] sm:$0xf]
    %v605 = vld [vmem:[#allocation4 + $0x730] sm:$0xf]
    %v606 = vld [vmem:[#allocation4 + $0x734] sm:$0xf]
    %v607 = vld [vmem:[#allocation4 + $0x738] sm:$0xf]
    %v608 = vld [vmem:[#allocation4 + $0x73c] sm:$0xf]
    %v609 = vld [vmem:[#allocation4 + $0x740] sm:$0xf]
    %v610 = vld [vmem:[#allocation4 + $0x744] sm:$0xf]
    %v611 = vld [vmem:[#allocation4 + $0x748] sm:$0xf]
    %v612 = vld [vmem:[#allocation4 + $0x74c] sm:$0xf]
    %v613 = vld [vmem:[#allocation4 + $0x750] sm:$0xf]
    %v614 = vld [vmem:[#allocation4 + $0x754] sm:$0xf]
    %v615 = vld [vmem:[#allocation4 + $0x758] sm:$0xf]
    %v616 = vld [vmem:[#allocation4 + $0x75c] sm:$0xf]
    %v617 = vld [vmem:[#allocation4 + $0x760] sm:$0xf]
    %v618 = vld [vmem:[#allocation4 + $0x764] sm:$0xf]
    %v619 = vld [vmem:[#allocation4 + $0x768] sm:$0xf]
    %v620 = vld [vmem:[#allocation4 + $0x76c] sm:$0xf]
    %v621 = vld [vmem:[#allocation4 + $0x770] sm:$0xf]
    %v622 = vld [vmem:[#allocation4 + $0x774] sm:$0xf]
    %v623 = vld [vmem:[#allocation4 + $0x778] sm:$0xf]
    %v624 = vld [vmem:[#allocation4 + $0x77c] sm:$0xf]
    %v625 = vld [vmem:[#allocation4 + $0x780] sm:$0xf]
    %v626 = vld [vmem:[#allocation4 + $0x784] sm:$0xf]
    %v627 = vld [vmem:[#allocation4 + $0x788] sm:$0xf]
    %v628 = vld [vmem:[#allocation4 + $0x78c] sm:$0xf]
    %v629 = vld [vmem:[#allocation4 + $0x790] sm:$0xf]
    %v630 = vld [vmem:[#allocation4 + $0x794] sm:$0xf]
    %v631 = vld [vmem:[#allocation4 + $0x798] sm:$0xf]
    %v632 = vld [vmem:[#allocation4 + $0x79c] sm:$0xf]
    %v633 = vld [vmem:[#allocation4 + $0x7a0] sm:$0xf]
    %v634 = vld [vmem:[#allocation4 + $0x7a4] sm:$0xf]
    %v635 = vld [vmem:[#allocation4 + $0x7a8] sm:$0xf]
    %v636 = vld [vmem:[#allocation4 + $0x7ac] sm:$0xf]
    %v637 = vld [vmem:[#allocation4 + $0x7b0] sm:$0xf]
    %v638 = vld [vmem:[#allocation4 + $0x7b4] sm:$0xf]
    %v639 = vld [vmem:[#allocation4 + $0x7b8] sm:$0xf]
    %v640 = vld [vmem:[#allocation4 + $0x7bc] sm:$0xf]
    %v641 = vld [vmem:[#allocation4 + $0x7c0] sm:$0xf]
    %v642 = vld [vmem:[#allocation4 + $0x7c4] sm:$0xf]
    %v643 = vld [vmem:[#allocation4 + $0x7c8] sm:$0xf]
    %v644 = vld [vmem:[#allocation4 + $0x7cc] sm:$0xf]
    %v645 = vld [vmem:[#allocation4 + $0x7d0] sm:$0xf]
    %v646 = vld [vmem:[#allocation4 + $0x7d4] sm:$0xf]
    %v647 = vld [vmem:[#allocation4 + $0x7d8] sm:$0xf]
    %v648 = vld [vmem:[#allocation4 + $0x7dc] sm:$0xf]
    %v649 = vld [vmem:[#allocation4 + $0x7e0] sm:$0xf]
    %v650 = vld [vmem:[#allocation4 + $0x7e4] sm:$0xf]
    %v651 = vld [vmem:[#allocation4 + $0x7e8] sm:$0xf]
    %v652 = vld [vmem:[#allocation4 + $0x7ec] sm:$0xf]
    %v653 = vld [vmem:[#allocation4 + $0x7f0] sm:$0xf]
    %v654 = vld [vmem:[#allocation4 + $0x7f4] sm:$0xf]
    %v655 = vld [vmem:[#allocation4 + $0x7f8] sm:$0xf]
    %v656 = vld [vmem:[#allocation4 + $0x7fc] sm:$0xf]
    %v657 = vld [vmem:[%s2] sm:$0x1]
    %v659 = vlaneseq
    %v660 = vshrl.u32 %v659, 7
    %v661 = vsub.s32 0, %v660
    %v662 = vrot.slane %v657, %v661
    %v1176 = vunpack.c.l.b16 %v145
    %v1177 = vunpack.c.l.b16 %v146
    %v1178 = vunpack.c.l.b16 %v147
    %v1179 = vunpack.c.l.b16 %v148
    %v1180 = vunpack.c.l.b16 %v149
    %v1181 = vunpack.c.l.b16 %v150
    %v1182 = vunpack.c.l.b16 %v151
    %v1183 = vunpack.c.l.b16 %v152
    %v1184 = vunpack.c.l.b16 %v153
    %v1185 = vunpack.c.l.b16 %v154
    %v1186 = vunpack.c.l.b16 %v155
    %v1187 = vunpack.c.l.b16 %v156
    %v1188 = vunpack.c.l.b16 %v157
    %v1189 = vunpack.c.l.b16 %v158
    %v1190 = vunpack.c.l.b16 %v159
    %v1191 = vunpack.c.l.b16 %v160
    %v1192 = vunpack.c.l.b16 %v161
    %v1193 = vunpack.c.l.b16 %v162
    %v1194 = vunpack.c.l.b16 %v163
    %v1195 = vunpack.c.l.b16 %v164
    %v1196 = vunpack.c.l.b16 %v165
    %v1197 = vunpack.c.l.b16 %v166
    %v1198 = vunpack.c.l.b16 %v167
    %v1199 = vunpack.c.l.b16 %v168
    %v1200 = vunpack.c.l.b16 %v169
    %v1201 = vunpack.c.l.b16 %v170
    %v1202 = vunpack.c.l.b16 %v171
    %v1203 = vunpack.c.l.b16 %v172
    %v1204 = vunpack.c.l.b16 %v173
    %v1205 = vunpack.c.l.b16 %v174
    %v1206 = vunpack.c.l.b16 %v175
    %v1207 = vunpack.c.l.b16 %v176
    %v1208 = vunpack.c.l.b16 %v177
    %v1209 = vunpack.c.l.b16 %v178
    %v1210 = vunpack.c.l.b16 %v179
    %v1211 = vunpack.c.l.b16 %v180
    %v1212 = vunpack.c.l.b16 %v181
    %v1213 = vunpack.c.l.b16 %v182
    %v1214 = vunpack.c.l.b16 %v183
    %v1215 = vunpack.c.l.b16 %v184
    %v1216 = vunpack.c.l.b16 %v185
    %v1217 = vunpack.c.l.b16 %v186
    %v1218 = vunpack.c.l.b16 %v187
    %v1219 = vunpack.c.l.b16 %v188
    %v1220 = vunpack.c.l.b16 %v189
    %v1221 = vunpack.c.l.b16 %v190
    %v1222 = vunpack.c.l.b16 %v191
    %v1223 = vunpack.c.l.b16 %v192
    %v1224 = vunpack.c.l.b16 %v193
    %v1225 = vunpack.c.l.b16 %v194
    %v1226 = vunpack.c.l.b16 %v195
    %v1227 = vunpack.c.l.b16 %v196
    %v1228 = vunpack.c.l.b16 %v197
    %v1229 = vunpack.c.l.b16 %v198
    %v1230 = vunpack.c.l.b16 %v199
    %v1231 = vunpack.c.l.b16 %v200
    %v1232 = vunpack.c.l.b16 %v201
    %v1233 = vunpack.c.l.b16 %v202
    %v1234 = vunpack.c.l.b16 %v203
    %v1235 = vunpack.c.l.b16 %v204
    %v1236 = vunpack.c.l.b16 %v205
    %v1237 = vunpack.c.l.b16 %v206
    %v1238 = vunpack.c.l.b16 %v207
    %v1239 = vunpack.c.l.b16 %v208
    %v1240 = vunpack.c.l.b16 %v209
    %v1241 = vunpack.c.l.b16 %v210
    %v1242 = vunpack.c.l.b16 %v211
    %v1243 = vunpack.c.l.b16 %v212
    %v1244 = vunpack.c.l.b16 %v213
    %v1245 = vunpack.c.l.b16 %v214
    %v1246 = vunpack.c.l.b16 %v215
    %v1247 = vunpack.c.l.b16 %v216
    %v1248 = vunpack.c.l.b16 %v217
    %v1249 = vunpack.c.l.b16 %v218
    %v1250 = vunpack.c.l.b16 %v219
    %v1251 = vunpack.c.l.b16 %v220
    %v1252 = vunpack.c.l.b16 %v221
    %v1253 = vunpack.c.l.b16 %v222
    %v1254 = vunpack.c.l.b16 %v223
    %v1255 = vunpack.c.l.b16 %v224
    %v1256 = vunpack.c.l.b16 %v225
    %v1257 = vunpack.c.l.b16 %v226
    %v1258 = vunpack.c.l.b16 %v227
    %v1259 = vunpack.c.l.b16 %v228
    %v1260 = vunpack.c.l.b16 %v229
    %v1261 = vunpack.c.l.b16 %v230
    %v1262 = vunpack.c.l.b16 %v231
    %v1263 = vunpack.c.l.b16 %v232
    %v1264 = vunpack.c.l.b16 %v233
    %v1265 = vunpack.c.l.b16 %v234
    %v1266 = vunpack.c.l.b16 %v235
    %v1267 = vunpack.c.l.b16 %v236
    %v1268 = vunpack.c.l.b16 %v237
    %v1269 = vunpack.c.l.b16 %v238
    %v1270 = vunpack.c.l.b16 %v239
    %v1271 = vunpack.c.l.b16 %v240
    %v1272 = vunpack.c.l.b16 %v241
    %v1273 = vunpack.c.l.b16 %v242
    %v1274 = vunpack.c.l.b16 %v243
    %v1275 = vunpack.c.l.b16 %v244
    %v1276 = vunpack.c.l.b16 %v245
    %v1277 = vunpack.c.l.b16 %v246
    %v1278 = vunpack.c.l.b16 %v247
    %v1279 = vunpack.c.l.b16 %v248
    %v1280 = vunpack.c.l.b16 %v249
    %v1281 = vunpack.c.l.b16 %v250
    %v1282 = vunpack.c.l.b16 %v251
    %v1283 = vunpack.c.l.b16 %v252
    %v1284 = vunpack.c.l.b16 %v253
    %v1285 = vunpack.c.l.b16 %v254
    %v1286 = vunpack.c.l.b16 %v255
    %v1287 = vunpack.c.l.b16 %v256
    %v1288 = vunpack.c.l.b16 %v257
    %v1289 = vunpack.c.l.b16 %v258
    %v1290 = vunpack.c.l.b16 %v259
    %v1291 = vunpack.c.l.b16 %v260
    %v1292 = vunpack.c.l.b16 %v261
    %v1293 = vunpack.c.l.b16 %v262
    %v1294 = vunpack.c.l.b16 %v263
    %v1295 = vunpack.c.l.b16 %v264
    %v1296 = vunpack.c.l.b16 %v265
    %v1297 = vunpack.c.l.b16 %v266
    %v1298 = vunpack.c.l.b16 %v267
    %v1299 = vunpack.c.l.b16 %v268
    %v1300 = vunpack.c.l.b16 %v269
    %v1301 = vunpack.c.l.b16 %v270
    %v1302 = vunpack.c.l.b16 %v271
    %v1303 = vunpack.c.l.b16 %v272
    %v1304 = vunpack.c.l.b16 %v273
    %v1305 = vunpack.c.l.b16 %v274
    %v1306 = vunpack.c.l.b16 %v275
    %v1307 = vunpack.c.l.b16 %v276
    %v1308 = vunpack.c.l.b16 %v277
    %v1309 = vunpack.c.l.b16 %v278
    %v1310 = vunpack.c.l.b16 %v279
    %v1311 = vunpack.c.l.b16 %v280
    %v1312 = vunpack.c.l.b16 %v281
    %v1313 = vunpack.c.l.b16 %v282
    %v1314 = vunpack.c.l.b16 %v283
    %v1315 = vunpack.c.l.b16 %v284
    %v1316 = vunpack.c.l.b16 %v285
    %v1317 = vunpack.c.l.b16 %v286
    %v1318 = vunpack.c.l.b16 %v287
    %v1319 = vunpack.c.l.b16 %v288
    %v1320 = vunpack.c.l.b16 %v289
    %v1321 = vunpack.c.l.b16 %v290
    %v1322 = vunpack.c.l.b16 %v291
    %v1323 = vunpack.c.l.b16 %v292
    %v1324 = vunpack.c.l.b16 %v293
    %v1325 = vunpack.c.l.b16 %v294
    %v1326 = vunpack.c.l.b16 %v295
    %v1327 = vunpack.c.l.b16 %v296
    %v1328 = vunpack.c.l.b16 %v297
    %v1329 = vunpack.c.l.b16 %v298
    %v1330 = vunpack.c.l.b16 %v299
    %v1331 = vunpack.c.l.b16 %v300
    %v1332 = vunpack.c.l.b16 %v301
    %v1333 = vunpack.c.l.b16 %v302
    %v1334 = vunpack.c.l.b16 %v303
    %v1335 = vunpack.c.l.b16 %v304
    %v1336 = vunpack.c.l.b16 %v305
    %v1337 = vunpack.c.l.b16 %v306
    %v1338 = vunpack.c.l.b16 %v307
    %v1339 = vunpack.c.l.b16 %v308
    %v1340 = vunpack.c.l.b16 %v309
    %v1341 = vunpack.c.l.b16 %v310
    %v1342 = vunpack.c.l.b16 %v311
    %v1343 = vunpack.c.l.b16 %v312
    %v1344 = vunpack.c.l.b16 %v313
    %v1345 = vunpack.c.l.b16 %v314
    %v1346 = vunpack.c.l.b16 %v315
    %v1347 = vunpack.c.l.b16 %v316
    %v1348 = vunpack.c.l.b16 %v317
    %v1349 = vunpack.c.l.b16 %v318
    %v1350 = vunpack.c.l.b16 %v319
    %v1351 = vunpack.c.l.b16 %v320
    %v1352 = vunpack.c.l.b16 %v321
    %v1353 = vunpack.c.l.b16 %v322
    %v1354 = vunpack.c.l.b16 %v323
    %v1355 = vunpack.c.l.b16 %v324
    %v1356 = vunpack.c.l.b16 %v325
    %v1357 = vunpack.c.l.b16 %v326
    %v1358 = vunpack.c.l.b16 %v327
    %v1359 = vunpack.c.l.b16 %v328
    %v1360 = vunpack.c.l.b16 %v329
    %v1361 = vunpack.c.l.b16 %v330
    %v1362 = vunpack.c.l.b16 %v331
    %v1363 = vunpack.c.l.b16 %v332
    %v1364 = vunpack.c.l.b16 %v333
    %v1365 = vunpack.c.l.b16 %v334
    %v1366 = vunpack.c.l.b16 %v335
    %v1367 = vunpack.c.l.b16 %v336
    %v1368 = vunpack.c.l.b16 %v337
    %v1369 = vunpack.c.l.b16 %v338
    %v1370 = vunpack.c.l.b16 %v339
    %v1371 = vunpack.c.l.b16 %v340
    %v1372 = vunpack.c.l.b16 %v341
    %v1373 = vunpack.c.l.b16 %v342
    %v1374 = vunpack.c.l.b16 %v343
    %v1375 = vunpack.c.l.b16 %v344
    %v1376 = vunpack.c.l.b16 %v345
    %v1377 = vunpack.c.l.b16 %v346
    %v1378 = vunpack.c.l.b16 %v347
    %v1379 = vunpack.c.l.b16 %v348
    %v1380 = vunpack.c.l.b16 %v349
    %v1381 = vunpack.c.l.b16 %v350
    %v1382 = vunpack.c.l.b16 %v351
    %v1383 = vunpack.c.l.b16 %v352
    %v1384 = vunpack.c.l.b16 %v353
    %v1385 = vunpack.c.l.b16 %v354
    %v1386 = vunpack.c.l.b16 %v355
    %v1387 = vunpack.c.l.b16 %v356
    %v1388 = vunpack.c.l.b16 %v357
    %v1389 = vunpack.c.l.b16 %v358
    %v1390 = vunpack.c.l.b16 %v359
    %v1391 = vunpack.c.l.b16 %v360
    %v1392 = vunpack.c.l.b16 %v361
    %v1393 = vunpack.c.l.b16 %v362
    %v1394 = vunpack.c.l.b16 %v363
    %v1395 = vunpack.c.l.b16 %v364
    %v1396 = vunpack.c.l.b16 %v365
    %v1397 = vunpack.c.l.b16 %v366
    %v1398 = vunpack.c.l.b16 %v367
    %v1399 = vunpack.c.l.b16 %v368
    %v1400 = vunpack.c.l.b16 %v369
    %v1401 = vunpack.c.l.b16 %v370
    %v1402 = vunpack.c.l.b16 %v371
    %v1403 = vunpack.c.l.b16 %v372
    %v1404 = vunpack.c.l.b16 %v373
    %v1405 = vunpack.c.l.b16 %v374
    %v1406 = vunpack.c.l.b16 %v375
    %v1407 = vunpack.c.l.b16 %v376
    %v1408 = vunpack.c.l.b16 %v377
    %v1409 = vunpack.c.l.b16 %v378
    %v1410 = vunpack.c.l.b16 %v379
    %v1411 = vunpack.c.l.b16 %v380
    %v1412 = vunpack.c.l.b16 %v381
    %v1413 = vunpack.c.l.b16 %v382
    %v1414 = vunpack.c.l.b16 %v383
    %v1415 = vunpack.c.l.b16 %v384
    %v1416 = vunpack.c.l.b16 %v385
    %v1417 = vunpack.c.l.b16 %v386
    %v1418 = vunpack.c.l.b16 %v387
    %v1419 = vunpack.c.l.b16 %v388
    %v1420 = vunpack.c.l.b16 %v389
    %v1421 = vunpack.c.l.b16 %v390
    %v1422 = vunpack.c.l.b16 %v391
    %v1423 = vunpack.c.l.b16 %v392
    %v1424 = vunpack.c.l.b16 %v393
    %v1425 = vunpack.c.l.b16 %v394
    %v1426 = vunpack.c.l.b16 %v395
    %v1427 = vunpack.c.l.b16 %v396
    %v1428 = vunpack.c.l.b16 %v397
    %v1429 = vunpack.c.l.b16 %v398
    %v1430 = vunpack.c.l.b16 %v399
    %v1431 = vunpack.c.l.b16 %v400
    %v1432 = vunpack.c.l.b16 %v401
    %v1433 = vunpack.c.l.b16 %v402
    %v1434 = vunpack.c.l.b16 %v403
    %v1435 = vunpack.c.l.b16 %v404
    %v1436 = vunpack.c.l.b16 %v405
    %v1437 = vunpack.c.l.b16 %v406
    %v1438 = vunpack.c.l.b16 %v407
    %v1439 = vunpack.c.l.b16 %v408
    %v1440 = vunpack.c.l.b16 %v409
    %v1441 = vunpack.c.l.b16 %v410
    %v1442 = vunpack.c.l.b16 %v411
    %v1443 = vunpack.c.l.b16 %v412
    %v1444 = vunpack.c.l.b16 %v413
    %v1445 = vunpack.c.l.b16 %v414
    %v1446 = vunpack.c.l.b16 %v415
    %v1447 = vunpack.c.l.b16 %v416
    %v1448 = vunpack.c.l.b16 %v417
    %v1449 = vunpack.c.l.b16 %v418
    %v1450 = vunpack.c.l.b16 %v419
    %v1451 = vunpack.c.l.b16 %v420
    %v1452 = vunpack.c.l.b16 %v421
    %v1453 = vunpack.c.l.b16 %v422
    %v1454 = vunpack.c.l.b16 %v423
    %v1455 = vunpack.c.l.b16 %v424
    %v1456 = vunpack.c.l.b16 %v425
    %v1457 = vunpack.c.l.b16 %v426
    %v1458 = vunpack.c.l.b16 %v427
    %v1459 = vunpack.c.l.b16 %v428
    %v1460 = vunpack.c.l.b16 %v429
    %v1461 = vunpack.c.l.b16 %v430
    %v1462 = vunpack.c.l.b16 %v431
    %v1463 = vunpack.c.l.b16 %v432
    %v1464 = vunpack.c.l.b16 %v433
    %v1465 = vunpack.c.l.b16 %v434
    %v1466 = vunpack.c.l.b16 %v435
    %v1467 = vunpack.c.l.b16 %v436
    %v1468 = vunpack.c.l.b16 %v437
    %v1469 = vunpack.c.l.b16 %v438
    %v1470 = vunpack.c.l.b16 %v439
    %v1471 = vunpack.c.l.b16 %v440
    %v1472 = vunpack.c.l.b16 %v441
    %v1473 = vunpack.c.l.b16 %v442
    %v1474 = vunpack.c.l.b16 %v443
    %v1475 = vunpack.c.l.b16 %v444
    %v1476 = vunpack.c.l.b16 %v445
    %v1477 = vunpack.c.l.b16 %v446
    %v1478 = vunpack.c.l.b16 %v447
    %v1479 = vunpack.c.l.b16 %v448
    %v1480 = vunpack.c.l.b16 %v449
    %v1481 = vunpack.c.l.b16 %v450
    %v1482 = vunpack.c.l.b16 %v451
    %v1483 = vunpack.c.l.b16 %v452
    %v1484 = vunpack.c.l.b16 %v453
    %v1485 = vunpack.c.l.b16 %v454
    %v1486 = vunpack.c.l.b16 %v455
    %v1487 = vunpack.c.l.b16 %v456
    %v1488 = vunpack.c.l.b16 %v457
    %v1489 = vunpack.c.l.b16 %v458
    %v1490 = vunpack.c.l.b16 %v459
    %v1491 = vunpack.c.l.b16 %v460
    %v1492 = vunpack.c.l.b16 %v461
    %v1493 = vunpack.c.l.b16 %v462
    %v1494 = vunpack.c.l.b16 %v463
    %v1495 = vunpack.c.l.b16 %v464
    %v1496 = vunpack.c.l.b16 %v465
    %v1497 = vunpack.c.l.b16 %v466
    %v1498 = vunpack.c.l.b16 %v467
    %v1499 = vunpack.c.l.b16 %v468
    %v1500 = vunpack.c.l.b16 %v469
    %v1501 = vunpack.c.l.b16 %v470
    %v1502 = vunpack.c.l.b16 %v471
    %v1503 = vunpack.c.l.b16 %v472
    %v1504 = vunpack.c.l.b16 %v473
    %v1505 = vunpack.c.l.b16 %v474
    %v1506 = vunpack.c.l.b16 %v475
    %v1507 = vunpack.c.l.b16 %v476
    %v1508 = vunpack.c.l.b16 %v477
    %v1509 = vunpack.c.l.b16 %v478
    %v1510 = vunpack.c.l.b16 %v479
    %v1511 = vunpack.c.l.b16 %v480
    %v1512 = vunpack.c.l.b16 %v481
    %v1513 = vunpack.c.l.b16 %v482
    %v1514 = vunpack.c.l.b16 %v483
    %v1515 = vunpack.c.l.b16 %v484
    %v1516 = vunpack.c.l.b16 %v485
    %v1517 = vunpack.c.l.b16 %v486
    %v1518 = vunpack.c.l.b16 %v487
    %v1519 = vunpack.c.l.b16 %v488
    %v1520 = vunpack.c.l.b16 %v489
    %v1521 = vunpack.c.l.b16 %v490
    %v1522 = vunpack.c.l.b16 %v491
    %v1523 = vunpack.c.l.b16 %v492
    %v1524 = vunpack.c.l.b16 %v493
    %v1525 = vunpack.c.l.b16 %v494
    %v1526 = vunpack.c.l.b16 %v495
    %v1527 = vunpack.c.l.b16 %v496
    %v1528 = vunpack.c.l.b16 %v497
    %v1529 = vunpack.c.l.b16 %v498
    %v1530 = vunpack.c.l.b16 %v499
    %v1531 = vunpack.c.l.b16 %v500
    %v1532 = vunpack.c.l.b16 %v501
    %v1533 = vunpack.c.l.b16 %v502
    %v1534 = vunpack.c.l.b16 %v503
    %v1535 = vunpack.c.l.b16 %v504
    %v1536 = vunpack.c.l.b16 %v505
    %v1537 = vunpack.c.l.b16 %v506
    %v1538 = vunpack.c.l.b16 %v507
    %v1539 = vunpack.c.l.b16 %v508
    %v1540 = vunpack.c.l.b16 %v509
    %v1541 = vunpack.c.l.b16 %v510
    %v1542 = vunpack.c.l.b16 %v511
    %v1543 = vunpack.c.l.b16 %v512
    %v1544 = vunpack.c.l.b16 %v513
    %v1545 = vunpack.c.l.b16 %v514
    %v1546 = vunpack.c.l.b16 %v515
    %v1547 = vunpack.c.l.b16 %v516
    %v1548 = vunpack.c.l.b16 %v517
    %v1549 = vunpack.c.l.b16 %v518
    %v1550 = vunpack.c.l.b16 %v519
    %v1551 = vunpack.c.l.b16 %v520
    %v1552 = vunpack.c.l.b16 %v521
    %v1553 = vunpack.c.l.b16 %v522
    %v1554 = vunpack.c.l.b16 %v523
    %v1555 = vunpack.c.l.b16 %v524
    %v1556 = vunpack.c.l.b16 %v525
    %v1557 = vunpack.c.l.b16 %v526
    %v1558 = vunpack.c.l.b16 %v527
    %v1559 = vunpack.c.l.b16 %v528
    %v1560 = vunpack.c.l.b16 %v529
    %v1561 = vunpack.c.l.b16 %v530
    %v1562 = vunpack.c.l.b16 %v531
    %v1563 = vunpack.c.l.b16 %v532
    %v1564 = vunpack.c.l.b16 %v533
    %v1565 = vunpack.c.l.b16 %v534
    %v1566 = vunpack.c.l.b16 %v535
    %v1567 = vunpack.c.l.b16 %v536
    %v1568 = vunpack.c.l.b16 %v537
    %v1569 = vunpack.c.l.b16 %v538
    %v1570 = vunpack.c.l.b16 %v539
    %v1571 = vunpack.c.l.b16 %v540
    %v1572 = vunpack.c.l.b16 %v541
    %v1573 = vunpack.c.l.b16 %v542
    %v1574 = vunpack.c.l.b16 %v543
    %v1575 = vunpack.c.l.b16 %v544
    %v1576 = vunpack.c.l.b16 %v545
    %v1577 = vunpack.c.l.b16 %v546
    %v1578 = vunpack.c.l.b16 %v547
    %v1579 = vunpack.c.l.b16 %v548
    %v1580 = vunpack.c.l.b16 %v549
    %v1581 = vunpack.c.l.b16 %v550
    %v1582 = vunpack.c.l.b16 %v551
    %v1583 = vunpack.c.l.b16 %v552
    %v1584 = vunpack.c.l.b16 %v553
    %v1585 = vunpack.c.l.b16 %v554
    %v1586 = vunpack.c.l.b16 %v555
    %v1587 = vunpack.c.l.b16 %v556
    %v1588 = vunpack.c.l.b16 %v557
    %v1589 = vunpack.c.l.b16 %v558
    %v1590 = vunpack.c.l.b16 %v559
    %v1591 = vunpack.c.l.b16 %v560
    %v1592 = vunpack.c.l.b16 %v561
    %v1593 = vunpack.c.l.b16 %v562
    %v1594 = vunpack.c.l.b16 %v563
    %v1595 = vunpack.c.l.b16 %v564
    %v1596 = vunpack.c.l.b16 %v565
    %v1597 = vunpack.c.l.b16 %v566
    %v1598 = vunpack.c.l.b16 %v567
    %v1599 = vunpack.c.l.b16 %v568
    %v1600 = vunpack.c.l.b16 %v569
    %v1601 = vunpack.c.l.b16 %v570
    %v1602 = vunpack.c.l.b16 %v571
    %v1603 = vunpack.c.l.b16 %v572
    %v1604 = vunpack.c.l.b16 %v573
    %v1605 = vunpack.c.l.b16 %v574
    %v1606 = vunpack.c.l.b16 %v575
    %v1607 = vunpack.c.l.b16 %v576
    %v1608 = vunpack.c.l.b16 %v577
    %v1609 = vunpack.c.l.b16 %v578
    %v1610 = vunpack.c.l.b16 %v579
    %v1611 = vunpack.c.l.b16 %v580
    %v1612 = vunpack.c.l.b16 %v581
    %v1613 = vunpack.c.l.b16 %v582
    %v1614 = vunpack.c.l.b16 %v583
    %v1615 = vunpack.c.l.b16 %v584
    %v1616 = vunpack.c.l.b16 %v585
    %v1617 = vunpack.c.l.b16 %v586
    %v1618 = vunpack.c.l.b16 %v587
    %v1619 = vunpack.c.l.b16 %v588
    %v1620 = vunpack.c.l.b16 %v589
    %v1621 = vunpack.c.l.b16 %v590
    %v1622 = vunpack.c.l.b16 %v591
    %v1623 = vunpack.c.l.b16 %v592
    %v1624 = vunpack.c.l.b16 %v593
    %v1625 = vunpack.c.l.b16 %v594
    %v1626 = vunpack.c.l.b16 %v595
    %v1627 = vunpack.c.l.b16 %v596
    %v1628 = vunpack.c.l.b16 %v597
    %v1629 = vunpack.c.l.b16 %v598
    %v1630 = vunpack.c.l.b16 %v599
    %v1631 = vunpack.c.l.b16 %v600
    %v1632 = vunpack.c.l.b16 %v601
    %v1633 = vunpack.c.l.b16 %v602
    %v1634 = vunpack.c.l.b16 %v603
    %v1635 = vunpack.c.l.b16 %v604
    %v1636 = vunpack.c.l.b16 %v605
    %v1637 = vunpack.c.l.b16 %v606
    %v1638 = vunpack.c.l.b16 %v607
    %v1639 = vunpack.c.l.b16 %v608
    %v1640 = vunpack.c.l.b16 %v609
    %v1641 = vunpack.c.l.b16 %v610
    %v1642 = vunpack.c.l.b16 %v611
    %v1643 = vunpack.c.l.b16 %v612
    %v1644 = vunpack.c.l.b16 %v613
    %v1645 = vunpack.c.l.b16 %v614
    %v1646 = vunpack.c.l.b16 %v615
    %v1647 = vunpack.c.l.b16 %v616
    %v1648 = vunpack.c.l.b16 %v617
    %v1649 = vunpack.c.l.b16 %v618
    %v1650 = vunpack.c.l.b16 %v619
    %v1651 = vunpack.c.l.b16 %v620
    %v1652 = vunpack.c.l.b16 %v621
    %v1653 = vunpack.c.l.b16 %v622
    %v1654 = vunpack.c.l.b16 %v623
    %v1655 = vunpack.c.l.b16 %v624
    %v1656 = vunpack.c.l.b16 %v625
    %v1657 = vunpack.c.l.b16 %v626
    %v1658 = vunpack.c.l.b16 %v627
    %v1659 = vunpack.c.l.b16 %v628
    %v1660 = vunpack.c.l.b16 %v629
    %v1661 = vunpack.c.l.b16 %v630
    %v1662 = vunpack.c.l.b16 %v631
    %v1663 = vunpack.c.l.b16 %v632
    %v1664 = vunpack.c.l.b16 %v633
    %v1665 = vunpack.c.l.b16 %v634
    %v1666 = vunpack.c.l.b16 %v635
    %v1667 = vunpack.c.l.b16 %v636
    %v1668 = vunpack.c.l.b16 %v637
    %v1669 = vunpack.c.l.b16 %v638
    %v1670 = vunpack.c.l.b16 %v639
    %v1671 = vunpack.c.l.b16 %v640
    %v1672 = vunpack.c.l.b16 %v641
    %v1673 = vunpack.c.l.b16 %v642
    %v1674 = vunpack.c.l.b16 %v643
    %v1675 = vunpack.c.l.b16 %v644
    %v1676 = vunpack.c.l.b16 %v645
    %v1677 = vunpack.c.l.b16 %v646
    %v1678 = vunpack.c.l.b16 %v647
    %v1679 = vunpack.c.l.b16 %v648
    %v1680 = vunpack.c.l.b16 %v649
    %v1681 = vunpack.c.l.b16 %v650
    %v1682 = vunpack.c.l.b16 %v651
    %v1683 = vunpack.c.l.b16 %v652
    %v1684 = vunpack.c.l.b16 %v653
    %v1685 = vunpack.c.l.b16 %v654
    %v1686 = vunpack.c.l.b16 %v655
    %v1687 = vunpack.c.l.b16 %v656
    %v1688 = vpack.c.b16 %v1177, %v1176
    %v1689 = vpack.c.b16 %v1179, %v1178
    %v1690 = vpack.c.b16 %v1181, %v1180
    %v1691 = vpack.c.b16 %v1183, %v1182
    %v1692 = vpack.c.b16 %v1185, %v1184
    %v1693 = vpack.c.b16 %v1187, %v1186
    %v1694 = vpack.c.b16 %v1189, %v1188
    %v1695 = vpack.c.b16 %v1191, %v1190
    %v1696 = vpack.c.b16 %v1193, %v1192
    %v1697 = vpack.c.b16 %v1195, %v1194
    %v1698 = vpack.c.b16 %v1197, %v1196
    %v1699 = vpack.c.b16 %v1199, %v1198
    %v1700 = vpack.c.b16 %v1201, %v1200
    %v1701 = vpack.c.b16 %v1203, %v1202
    %v1702 = vpack.c.b16 %v1205, %v1204
    %v1703 = vpack.c.b16 %v1207, %v1206
    %v1704 = vpack.c.b16 %v1209, %v1208
    %v1705 = vpack.c.b16 %v1211, %v1210
    %v1706 = vpack.c.b16 %v1213, %v1212
    %v1707 = vpack.c.b16 %v1215, %v1214
    %v1708 = vpack.c.b16 %v1217, %v1216
    %v1709 = vpack.c.b16 %v1219, %v1218
    %v1710 = vpack.c.b16 %v1221, %v1220
    %v1711 = vpack.c.b16 %v1223, %v1222
    %v1712 = vpack.c.b16 %v1225, %v1224
    %v1713 = vpack.c.b16 %v1227, %v1226
    %v1714 = vpack.c.b16 %v1229, %v1228
    %v1715 = vpack.c.b16 %v1231, %v1230
    %v1716 = vpack.c.b16 %v1233, %v1232
    %v1717 = vpack.c.b16 %v1235, %v1234
    %v1718 = vpack.c.b16 %v1237, %v1236
    %v1719 = vpack.c.b16 %v1239, %v1238
    %v1720 = vpack.c.b16 %v1241, %v1240
    %v1721 = vpack.c.b16 %v1243, %v1242
    %v1722 = vpack.c.b16 %v1245, %v1244
    %v1723 = vpack.c.b16 %v1247, %v1246
    %v1724 = vpack.c.b16 %v1249, %v1248
    %v1725 = vpack.c.b16 %v1251, %v1250
    %v1726 = vpack.c.b16 %v1253, %v1252
    %v1727 = vpack.c.b16 %v1255, %v1254
    %v1728 = vpack.c.b16 %v1257, %v1256
    %v1729 = vpack.c.b16 %v1259, %v1258
    %v1730 = vpack.c.b16 %v1261, %v1260
    %v1731 = vpack.c.b16 %v1263, %v1262
    %v1732 = vpack.c.b16 %v1265, %v1264
    %v1733 = vpack.c.b16 %v1267, %v1266
    %v1734 = vpack.c.b16 %v1269, %v1268
    %v1735 = vpack.c.b16 %v1271, %v1270
    %v1736 = vpack.c.b16 %v1273, %v1272
    %v1737 = vpack.c.b16 %v1275, %v1274
    %v1738 = vpack.c.b16 %v1277, %v1276
    %v1739 = vpack.c.b16 %v1279, %v1278
    %v1740 = vpack.c.b16 %v1281, %v1280
    %v1741 = vpack.c.b16 %v1283, %v1282
    %v1742 = vpack.c.b16 %v1285, %v1284
    %v1743 = vpack.c.b16 %v1287, %v1286
    %v1744 = vpack.c.b16 %v1289, %v1288
    %v1745 = vpack.c.b16 %v1291, %v1290
    %v1746 = vpack.c.b16 %v1293, %v1292
    %v1747 = vpack.c.b16 %v1295, %v1294
    %v1748 = vpack.c.b16 %v1297, %v1296
    %v1749 = vpack.c.b16 %v1299, %v1298
    %v1750 = vpack.c.b16 %v1301, %v1300
    %v1751 = vpack.c.b16 %v1303, %v1302
    %v1752 = vpack.c.b16 %v1305, %v1304
    %v1753 = vpack.c.b16 %v1307, %v1306
    %v1754 = vpack.c.b16 %v1309, %v1308
    %v1755 = vpack.c.b16 %v1311, %v1310
    %v1756 = vpack.c.b16 %v1313, %v1312
    %v1757 = vpack.c.b16 %v1315, %v1314
    %v1758 = vpack.c.b16 %v1317, %v1316
    %v1759 = vpack.c.b16 %v1319, %v1318
    %v1760 = vpack.c.b16 %v1321, %v1320
    %v1761 = vpack.c.b16 %v1323, %v1322
    %v1762 = vpack.c.b16 %v1325, %v1324
    %v1763 = vpack.c.b16 %v1327, %v1326
    %v1764 = vpack.c.b16 %v1329, %v1328
    %v1765 = vpack.c.b16 %v1331, %v1330
    %v1766 = vpack.c.b16 %v1333, %v1332
    %v1767 = vpack.c.b16 %v1335, %v1334
    %v1768 = vpack.c.b16 %v1337, %v1336
    %v1769 = vpack.c.b16 %v1339, %v1338
    %v1770 = vpack.c.b16 %v1341, %v1340
    %v1771 = vpack.c.b16 %v1343, %v1342
    %v1772 = vpack.c.b16 %v1345, %v1344
    %v1773 = vpack.c.b16 %v1347, %v1346
    %v1774 = vpack.c.b16 %v1349, %v1348
    %v1775 = vpack.c.b16 %v1351, %v1350
    %v1776 = vpack.c.b16 %v1353, %v1352
    %v1777 = vpack.c.b16 %v1355, %v1354
    %v1778 = vpack.c.b16 %v1357, %v1356
    %v1779 = vpack.c.b16 %v1359, %v1358
    %v1780 = vpack.c.b16 %v1361, %v1360
    %v1781 = vpack.c.b16 %v1363, %v1362
    %v1782 = vpack.c.b16 %v1365, %v1364
    %v1783 = vpack.c.b16 %v1367, %v1366
    %v1784 = vpack.c.b16 %v1369, %v1368
    %v1785 = vpack.c.b16 %v1371, %v1370
    %v1786 = vpack.c.b16 %v1373, %v1372
    %v1787 = vpack.c.b16 %v1375, %v1374
    %v1788 = vpack.c.b16 %v1377, %v1376
    %v1789 = vpack.c.b16 %v1379, %v1378
    %v1790 = vpack.c.b16 %v1381, %v1380
    %v1791 = vpack.c.b16 %v1383, %v1382
    %v1792 = vpack.c.b16 %v1385, %v1384
    %v1793 = vpack.c.b16 %v1387, %v1386
    %v1794 = vpack.c.b16 %v1389, %v1388
    %v1795 = vpack.c.b16 %v1391, %v1390
    %v1796 = vpack.c.b16 %v1393, %v1392
    %v1797 = vpack.c.b16 %v1395, %v1394
    %v1798 = vpack.c.b16 %v1397, %v1396
    %v1799 = vpack.c.b16 %v1399, %v1398
    %v1800 = vpack.c.b16 %v1401, %v1400
    %v1801 = vpack.c.b16 %v1403, %v1402
    %v1802 = vpack.c.b16 %v1405, %v1404
    %v1803 = vpack.c.b16 %v1407, %v1406
    %v1804 = vpack.c.b16 %v1409, %v1408
    %v1805 = vpack.c.b16 %v1411, %v1410
    %v1806 = vpack.c.b16 %v1413, %v1412
    %v1807 = vpack.c.b16 %v1415, %v1414
    %v1808 = vpack.c.b16 %v1417, %v1416
    %v1809 = vpack.c.b16 %v1419, %v1418
    %v1810 = vpack.c.b16 %v1421, %v1420
    %v1811 = vpack.c.b16 %v1423, %v1422
    %v1812 = vpack.c.b16 %v1425, %v1424
    %v1813 = vpack.c.b16 %v1427, %v1426
    %v1814 = vpack.c.b16 %v1429, %v1428
    %v1815 = vpack.c.b16 %v1431, %v1430
    %v1816 = vpack.c.b16 %v1433, %v1432
    %v1817 = vpack.c.b16 %v1435, %v1434
    %v1818 = vpack.c.b16 %v1437, %v1436
    %v1819 = vpack.c.b16 %v1439, %v1438
    %v1820 = vpack.c.b16 %v1441, %v1440
    %v1821 = vpack.c.b16 %v1443, %v1442
    %v1822 = vpack.c.b16 %v1445, %v1444
    %v1823 = vpack.c.b16 %v1447, %v1446
    %v1824 = vpack.c.b16 %v1449, %v1448
    %v1825 = vpack.c.b16 %v1451, %v1450
    %v1826 = vpack.c.b16 %v1453, %v1452
    %v1827 = vpack.c.b16 %v1455, %v1454
    %v1828 = vpack.c.b16 %v1457, %v1456
    %v1829 = vpack.c.b16 %v1459, %v1458
    %v1830 = vpack.c.b16 %v1461, %v1460
    %v1831 = vpack.c.b16 %v1463, %v1462
    %v1832 = vpack.c.b16 %v1465, %v1464
    %v1833 = vpack.c.b16 %v1467, %v1466
    %v1834 = vpack.c.b16 %v1469, %v1468
    %v1835 = vpack.c.b16 %v1471, %v1470
    %v1836 = vpack.c.b16 %v1473, %v1472
    %v1837 = vpack.c.b16 %v1475, %v1474
    %v1838 = vpack.c.b16 %v1477, %v1476
    %v1839 = vpack.c.b16 %v1479, %v1478
    %v1840 = vpack.c.b16 %v1481, %v1480
    %v1841 = vpack.c.b16 %v1483, %v1482
    %v1842 = vpack.c.b16 %v1485, %v1484
    %v1843 = vpack.c.b16 %v1487, %v1486
    %v1844 = vpack.c.b16 %v1489, %v1488
    %v1845 = vpack.c.b16 %v1491, %v1490
    %v1846 = vpack.c.b16 %v1493, %v1492
    %v1847 = vpack.c.b16 %v1495, %v1494
    %v1848 = vpack.c.b16 %v1497, %v1496
    %v1849 = vpack.c.b16 %v1499, %v1498
    %v1850 = vpack.c.b16 %v1501, %v1500
    %v1851 = vpack.c.b16 %v1503, %v1502
    %v1852 = vpack.c.b16 %v1505, %v1504
    %v1853 = vpack.c.b16 %v1507, %v1506
    %v1854 = vpack.c.b16 %v1509, %v1508
    %v1855 = vpack.c.b16 %v1511, %v1510
    %v1856 = vpack.c.b16 %v1513, %v1512
    %v1857 = vpack.c.b16 %v1515, %v1514
    %v1858 = vpack.c.b16 %v1517, %v1516
    %v1859 = vpack.c.b16 %v1519, %v1518
    %v1860 = vpack.c.b16 %v1521, %v1520
    %v1861 = vpack.c.b16 %v1523, %v1522
    %v1862 = vpack.c.b16 %v1525, %v1524
    %v1863 = vpack.c.b16 %v1527, %v1526
    %v1864 = vpack.c.b16 %v1529, %v1528
    %v1865 = vpack.c.b16 %v1531, %v1530
    %v1866 = vpack.c.b16 %v1533, %v1532
    %v1867 = vpack.c.b16 %v1535, %v1534
    %v1868 = vpack.c.b16 %v1537, %v1536
    %v1869 = vpack.c.b16 %v1539, %v1538
    %v1870 = vpack.c.b16 %v1541, %v1540
    %v1871 = vpack.c.b16 %v1543, %v1542
    %v1872 = vpack.c.b16 %v1545, %v1544
    %v1873 = vpack.c.b16 %v1547, %v1546
    %v1874 = vpack.c.b16 %v1549, %v1548
    %v1875 = vpack.c.b16 %v1551, %v1550
    %v1876 = vpack.c.b16 %v1553, %v1552
    %v1877 = vpack.c.b16 %v1555, %v1554
    %v1878 = vpack.c.b16 %v1557, %v1556
    %v1879 = vpack.c.b16 %v1559, %v1558
    %v1880 = vpack.c.b16 %v1561, %v1560
    %v1881 = vpack.c.b16 %v1563, %v1562
    %v1882 = vpack.c.b16 %v1565, %v1564
    %v1883 = vpack.c.b16 %v1567, %v1566
    %v1884 = vpack.c.b16 %v1569, %v1568
    %v1885 = vpack.c.b16 %v1571, %v1570
    %v1886 = vpack.c.b16 %v1573, %v1572
    %v1887 = vpack.c.b16 %v1575, %v1574
    %v1888 = vpack.c.b16 %v1577, %v1576
    %v1889 = vpack.c.b16 %v1579, %v1578
    %v1890 = vpack.c.b16 %v1581, %v1580
    %v1891 = vpack.c.b16 %v1583, %v1582
    %v1892 = vpack.c.b16 %v1585, %v1584
    %v1893 = vpack.c.b16 %v1587, %v1586
    %v1894 = vpack.c.b16 %v1589, %v1588
    %v1895 = vpack.c.b16 %v1591, %v1590
    %v1896 = vpack.c.b16 %v1593, %v1592
    %v1897 = vpack.c.b16 %v1595, %v1594
    %v1898 = vpack.c.b16 %v1597, %v1596
    %v1899 = vpack.c.b16 %v1599, %v1598
    %v1900 = vpack.c.b16 %v1601, %v1600
    %v1901 = vpack.c.b16 %v1603, %v1602
    %v1902 = vpack.c.b16 %v1605, %v1604
    %v1903 = vpack.c.b16 %v1607, %v1606
    %v1904 = vpack.c.b16 %v1609, %v1608
    %v1905 = vpack.c.b16 %v1611, %v1610
    %v1906 = vpack.c.b16 %v1613, %v1612
    %v1907 = vpack.c.b16 %v1615, %v1614
    %v1908 = vpack.c.b16 %v1617, %v1616
    %v1909 = vpack.c.b16 %v1619, %v1618
    %v1910 = vpack.c.b16 %v1621, %v1620
    %v1911 = vpack.c.b16 %v1623, %v1622
    %v1912 = vpack.c.b16 %v1625, %v1624
    %v1913 = vpack.c.b16 %v1627, %v1626
    %v1914 = vpack.c.b16 %v1629, %v1628
    %v1915 = vpack.c.b16 %v1631, %v1630
    %v1916 = vpack.c.b16 %v1633, %v1632
    %v1917 = vpack.c.b16 %v1635, %v1634
    %v1918 = vpack.c.b16 %v1637, %v1636
    %v1919 = vpack.c.b16 %v1639, %v1638
    %v1920 = vpack.c.b16 %v1641, %v1640
    %v1921 = vpack.c.b16 %v1643, %v1642
    %v1922 = vpack.c.b16 %v1645, %v1644
    %v1923 = vpack.c.b16 %v1647, %v1646
    %v1924 = vpack.c.b16 %v1649, %v1648
    %v1925 = vpack.c.b16 %v1651, %v1650
    %v1926 = vpack.c.b16 %v1653, %v1652
    %v1927 = vpack.c.b16 %v1655, %v1654
    %v1928 = vpack.c.b16 %v1657, %v1656
    %v1929 = vpack.c.b16 %v1659, %v1658
    %v1930 = vpack.c.b16 %v1661, %v1660
    %v1931 = vpack.c.b16 %v1663, %v1662
    %v1932 = vpack.c.b16 %v1665, %v1664
    %v1933 = vpack.c.b16 %v1667, %v1666
    %v1934 = vpack.c.b16 %v1669, %v1668
    %v1935 = vpack.c.b16 %v1671, %v1670
    %v1936 = vpack.c.b16 %v1673, %v1672
    %v1937 = vpack.c.b16 %v1675, %v1674
    %v1938 = vpack.c.b16 %v1677, %v1676
    %v1939 = vpack.c.b16 %v1679, %v1678
    %v1940 = vpack.c.b16 %v1681, %v1680
    %v1941 = vpack.c.b16 %v1683, %v1682
    %v1942 = vpack.c.b16 %v1685, %v1684
    %v1943 = vpack.c.b16 %v1687, %v1686
    %2200 = vmatprep.subr.bf16.mxu0 0
    %2201 = vmatpush1.bf16.msra.mxu0 %v1695
    %2202 = vmatprep.subr.bf16.mxu0 0
    %2203 = vmatpush1.bf16.msra.mxu0 %v1694
    %2204 = vmatprep.subr.bf16.mxu0 0
    %2205 = vmatpush1.bf16.msra.mxu0 %v1693
    %2206 = vmatprep.subr.bf16.mxu0 0
    %2207 = vmatpush1.bf16.msra.mxu0 %v1692
    %2208 = vmatprep.subr.bf16.mxu0 0
    %2209 = vmatpush1.bf16.msra.mxu0 %v1691
    %2210 = vmatprep.subr.bf16.mxu0 0
    %2211 = vmatpush1.bf16.msra.mxu0 %v1690
    %2212 = vmatprep.subr.bf16.mxu0 0
    %2213 = vmatpush1.bf16.msra.mxu0 %v1689
    %2214 = vmatprep.subr.bf16.mxu0 0
    %2215 = vmatpush1.bf16.msra.mxu0 %v1688
    %2216 = vmatprep.subr.bf16.mxu0 0
    %2217 = vmatpush2.bf16.msra.mxu0 %v1703
    %2218 = vmatprep.subr.bf16.mxu0 0
    %2219 = vmatpush2.bf16.msra.mxu0 %v1702
    %2220 = vmatprep.subr.bf16.mxu0 0
    %2221 = vmatpush2.bf16.msra.mxu0 %v1701
    %2222 = vmatprep.subr.bf16.mxu0 0
    %2223 = vmatpush2.bf16.msra.mxu0 %v1700
    %2224 = vmatprep.subr.bf16.mxu0 0
    %2225 = vmatpush2.bf16.msra.mxu0 %v1699
    %2226 = vmatprep.subr.bf16.mxu0 0
    %2227 = vmatpush2.bf16.msra.mxu0 %v1698
    %2228 = vmatprep.subr.bf16.mxu0 0
    %2229 = vmatpush2.bf16.msra.mxu0 %v1697
    %2230 = vmatprep.subr.bf16.mxu0 0
    %2231 = vmatpush2.bf16.msra.mxu0 %v1696
    %2232 = vmatprep.mubr.bf16.mxu0 %v114
    %2233 = vmatmul.mubr.bf16.gmra.mxu0 %v113
    %v2234 = vpop.f32.mrf.mxu0
    %v2235 = vadd.f32 %v662, %v2234
    %v2236 = vpop.f32.mrf.mxu0
    %v2237 = vpop.f32.mrf.mxu0
    %v2238 = vadd.f32 %v662, %v2237
    %v2239 = vpop.f32.mrf.mxu0
    %2240 = vdwg.mxu0
    %2241 = vmatprep.subr.bf16.mxu0 0
    %2242 = vmatpush1.bf16.msra.mxu0 %v1711
    %2243 = vmatprep.subr.bf16.mxu0 0
    %2244 = vmatpush1.bf16.msra.mxu0 %v1710
    %2245 = vmatprep.subr.bf16.mxu0 0
    %2246 = vmatpush1.bf16.msra.mxu0 %v1709
    %2247 = vmatprep.subr.bf16.mxu0 0
    %2248 = vmatpush1.bf16.msra.mxu0 %v1708
    %2249 = vmatprep.subr.bf16.mxu0 0
    %2250 = vmatpush1.bf16.msra.mxu0 %v1707
    %2251 = vmatprep.subr.bf16.mxu0 0
    %2252 = vmatpush1.bf16.msra.mxu0 %v1706
    %2253 = vmatprep.subr.bf16.mxu0 0
    %2254 = vmatpush1.bf16.msra.mxu0 %v1705
    %2255 = vmatprep.subr.bf16.mxu0 0
    %2256 = vmatpush1.bf16.msra.mxu0 %v1704
    %2257 = vmatprep.subr.bf16.mxu0 0
    %2258 = vmatpush2.bf16.msra.mxu0 %v1719
    %2259 = vmatprep.subr.bf16.mxu0 0
    %2260 = vmatpush2.bf16.msra.mxu0 %v1718
    %2261 = vmatprep.subr.bf16.mxu0 0
    %2262 = vmatpush2.bf16.msra.mxu0 %v1717
    %2263 = vmatprep.subr.bf16.mxu0 0
    %2264 = vmatpush2.bf16.msra.mxu0 %v1716
    %2265 = vmatprep.subr.bf16.mxu0 0
    %2266 = vmatpush2.bf16.msra.mxu0 %v1715
    %2267 = vmatprep.subr.bf16.mxu0 0
    %2268 = vmatpush2.bf16.msra.mxu0 %v1714
    %2269 = vmatprep.subr.bf16.mxu0 0
    %2270 = vmatpush2.bf16.msra.mxu0 %v1713
    %2271 = vmatprep.subr.bf16.mxu0 0
    %2272 = vmatpush2.bf16.msra.mxu0 %v1712
    %2273 = vmatprep.mubr.bf16.mxu0 %v116
    %2274 = vmatmul.mubr.bf16.gmra.mxu0 %v115
    %v2275 = vpop.f32.mrf.mxu0
    %v2276 = vadd.f32 %v2235, %v2275
    %v2277 = vpop.f32.mrf.mxu0
    %v2278 = vpop.f32.mrf.mxu0
    %v2279 = vadd.f32 %v2238, %v2278
    %v2280 = vpop.f32.mrf.mxu0
    %2281 = vdwg.mxu0
    %2282 = vmatprep.subr.bf16.mxu0 0
    %2283 = vmatpush1.bf16.msra.mxu0 %v1727
    %2284 = vmatprep.subr.bf16.mxu0 0
    %2285 = vmatpush1.bf16.msra.mxu0 %v1726
    %2286 = vmatprep.subr.bf16.mxu0 0
    %2287 = vmatpush1.bf16.msra.mxu0 %v1725
    %2288 = vmatprep.subr.bf16.mxu0 0
    %2289 = vmatpush1.bf16.msra.mxu0 %v1724
    %2290 = vmatprep.subr.bf16.mxu0 0
    %2291 = vmatpush1.bf16.msra.mxu0 %v1723
    %2292 = vmatprep.subr.bf16.mxu0 0
    %2293 = vmatpush1.bf16.msra.mxu0 %v1722
    %2294 = vmatprep.subr.bf16.mxu0 0
    %2295 = vmatpush1.bf16.msra.mxu0 %v1721
    %2296 = vmatprep.subr.bf16.mxu0 0
    %2297 = vmatpush1.bf16.msra.mxu0 %v1720
    %2298 = vmatprep.subr.bf16.mxu0 0
    %2299 = vmatpush2.bf16.msra.mxu0 %v1735
    %2300 = vmatprep.subr.bf16.mxu0 0
    %2301 = vmatpush2.bf16.msra.mxu0 %v1734
    %2302 = vmatprep.subr.bf16.mxu0 0
    %2303 = vmatpush2.bf16.msra.mxu0 %v1733
    %2304 = vmatprep.subr.bf16.mxu0 0
    %2305 = vmatpush2.bf16.msra.mxu0 %v1732
    %2306 = vmatprep.subr.bf16.mxu0 0
    %2307 = vmatpush2.bf16.msra.mxu0 %v1731
    %2308 = vmatprep.subr.bf16.mxu0 0
    %2309 = vmatpush2.bf16.msra.mxu0 %v1730
    %2310 = vmatprep.subr.bf16.mxu0 0
    %2311 = vmatpush2.bf16.msra.mxu0 %v1729
    %2312 = vmatprep.subr.bf16.mxu0 0
    %2313 = vmatpush2.bf16.msra.mxu0 %v1728
    %2314 = vmatprep.mubr.bf16.mxu0 %v118
    %2315 = vmatmul.mubr.bf16.gmra.mxu0 %v117
    %v2316 = vpop.f32.mrf.mxu0
    %v2317 = vadd.f32 %v2276, %v2316
    %v2318 = vpop.f32.mrf.mxu0
    %v2319 = vpop.f32.mrf.mxu0
    %v2320 = vadd.f32 %v2279, %v2319
    %v2321 = vpop.f32.mrf.mxu0
    %2322 = vdwg.mxu0
    %2323 = vmatprep.subr.bf16.mxu0 0
    %2324 = vmatpush1.bf16.msra.mxu0 %v1743
    %2325 = vmatprep.subr.bf16.mxu0 0
    %2326 = vmatpush1.bf16.msra.mxu0 %v1742
    %2327 = vmatprep.subr.bf16.mxu0 0
    %2328 = vmatpush1.bf16.msra.mxu0 %v1741
    %2329 = vmatprep.subr.bf16.mxu0 0
    %2330 = vmatpush1.bf16.msra.mxu0 %v1740
    %2331 = vmatprep.subr.bf16.mxu0 0
    %2332 = vmatpush1.bf16.msra.mxu0 %v1739
    %2333 = vmatprep.subr.bf16.mxu0 0
    %2334 = vmatpush1.bf16.msra.mxu0 %v1738
    %2335 = vmatprep.subr.bf16.mxu0 0
    %2336 = vmatpush1.bf16.msra.mxu0 %v1737
    %2337 = vmatprep.subr.bf16.mxu0 0
    %2338 = vmatpush1.bf16.msra.mxu0 %v1736
    %2339 = vmatprep.subr.bf16.mxu0 0
    %2340 = vmatpush2.bf16.msra.mxu0 %v1751
    %2341 = vmatprep.subr.bf16.mxu0 0
    %2342 = vmatpush2.bf16.msra.mxu0 %v1750
    %2343 = vmatprep.subr.bf16.mxu0 0
    %2344 = vmatpush2.bf16.msra.mxu0 %v1749
    %2345 = vmatprep.subr.bf16.mxu0 0
    %2346 = vmatpush2.bf16.msra.mxu0 %v1748
    %2347 = vmatprep.subr.bf16.mxu0 0
    %2348 = vmatpush2.bf16.msra.mxu0 %v1747
    %2349 = vmatprep.subr.bf16.mxu0 0
    %2350 = vmatpush2.bf16.msra.mxu0 %v1746
    %2351 = vmatprep.subr.bf16.mxu0 0
    %2352 = vmatpush2.bf16.msra.mxu0 %v1745
    %2353 = vmatprep.subr.bf16.mxu0 0
    %2354 = vmatpush2.bf16.msra.mxu0 %v1744
    %2355 = vmatprep.mubr.bf16.mxu0 %v120
    %2356 = vmatmul.mubr.bf16.gmra.mxu0 %v119
    %v2357 = vpop.f32.mrf.mxu0
    %v2358 = vadd.f32 %v2317, %v2357
    %v2359 = vpop.f32.mrf.mxu0
    %v2360 = vpop.f32.mrf.mxu0
    %v2361 = vadd.f32 %v2320, %v2360
    %v2362 = vpop.f32.mrf.mxu0
    %2363 = vdwg.mxu0
    %2364 = vmatprep.subr.bf16.mxu0 0
    %2365 = vmatpush1.bf16.msra.mxu0 %v1759
    %2366 = vmatprep.subr.bf16.mxu0 0
    %2367 = vmatpush1.bf16.msra.mxu0 %v1758
    %2368 = vmatprep.subr.bf16.mxu0 0
    %2369 = vmatpush1.bf16.msra.mxu0 %v1757
    %2370 = vmatprep.subr.bf16.mxu0 0
    %2371 = vmatpush1.bf16.msra.mxu0 %v1756
    %2372 = vmatprep.subr.bf16.mxu0 0
    %2373 = vmatpush1.bf16.msra.mxu0 %v1755
    %2374 = vmatprep.subr.bf16.mxu0 0
    %2375 = vmatpush1.bf16.msra.mxu0 %v1754
    %2376 = vmatprep.subr.bf16.mxu0 0
    %2377 = vmatpush1.bf16.msra.mxu0 %v1753
    %2378 = vmatprep.subr.bf16.mxu0 0
    %2379 = vmatpush1.bf16.msra.mxu0 %v1752
    %2380 = vmatprep.subr.bf16.mxu0 0
    %2381 = vmatpush2.bf16.msra.mxu0 %v1767
    %2382 = vmatprep.subr.bf16.mxu0 0
    %2383 = vmatpush2.bf16.msra.mxu0 %v1766
    %2384 = vmatprep.subr.bf16.mxu0 0
    %2385 = vmatpush2.bf16.msra.mxu0 %v1765
    %2386 = vmatprep.subr.bf16.mxu0 0
    %2387 = vmatpush2.bf16.msra.mxu0 %v1764
    %2388 = vmatprep.subr.bf16.mxu0 0
    %2389 = vmatpush2.bf16.msra.mxu0 %v1763
    %2390 = vmatprep.subr.bf16.mxu0 0
    %2391 = vmatpush2.bf16.msra.mxu0 %v1762
    %2392 = vmatprep.subr.bf16.mxu0 0
    %2393 = vmatpush2.bf16.msra.mxu0 %v1761
    %2394 = vmatprep.subr.bf16.mxu0 0
    %2395 = vmatpush2.bf16.msra.mxu0 %v1760
    %2396 = vmatprep.mubr.bf16.mxu0 %v122
    %2397 = vmatmul.mubr.bf16.gmra.mxu0 %v121
    %v2398 = vpop.f32.mrf.mxu0
    %v2399 = vadd.f32 %v2358, %v2398
    %v2400 = vpop.f32.mrf.mxu0
    %v2401 = vpop.f32.mrf.mxu0
    %v2402 = vadd.f32 %v2361, %v2401
    %v2403 = vpop.f32.mrf.mxu0
    %2404 = vdwg.mxu0
    %2405 = vmatprep.subr.bf16.mxu0 0
    %2406 = vmatpush1.bf16.msra.mxu0 %v1775
    %2407 = vmatprep.subr.bf16.mxu0 0
    %2408 = vmatpush1.bf16.msra.mxu0 %v1774
    %2409 = vmatprep.subr.bf16.mxu0 0
    %2410 = vmatpush1.bf16.msra.mxu0 %v1773
    %2411 = vmatprep.subr.bf16.mxu0 0
    %2412 = vmatpush1.bf16.msra.mxu0 %v1772
    %2413 = vmatprep.subr.bf16.mxu0 0
    %2414 = vmatpush1.bf16.msra.mxu0 %v1771
    %2415 = vmatprep.subr.bf16.mxu0 0
    %2416 = vmatpush1.bf16.msra.mxu0 %v1770
    %2417 = vmatprep.subr.bf16.mxu0 0
    %2418 = vmatpush1.bf16.msra.mxu0 %v1769
    %2419 = vmatprep.subr.bf16.mxu0 0
    %2420 = vmatpush1.bf16.msra.mxu0 %v1768
    %2421 = vmatprep.subr.bf16.mxu0 0
    %2422 = vmatpush2.bf16.msra.mxu0 %v1783
    %2423 = vmatprep.subr.bf16.mxu0 0
    %2424 = vmatpush2.bf16.msra.mxu0 %v1782
    %2425 = vmatprep.subr.bf16.mxu0 0
    %2426 = vmatpush2.bf16.msra.mxu0 %v1781
    %2427 = vmatprep.subr.bf16.mxu0 0
    %2428 = vmatpush2.bf16.msra.mxu0 %v1780
    %2429 = vmatprep.subr.bf16.mxu0 0
    %2430 = vmatpush2.bf16.msra.mxu0 %v1779
    %2431 = vmatprep.subr.bf16.mxu0 0
    %2432 = vmatpush2.bf16.msra.mxu0 %v1778
    %2433 = vmatprep.subr.bf16.mxu0 0
    %2434 = vmatpush2.bf16.msra.mxu0 %v1777
    %2435 = vmatprep.subr.bf16.mxu0 0
    %2436 = vmatpush2.bf16.msra.mxu0 %v1776
    %2437 = vmatprep.mubr.bf16.mxu0 %v124
    %2438 = vmatmul.mubr.bf16.gmra.mxu0 %v123
    %v2439 = vpop.f32.mrf.mxu0
    %v2440 = vadd.f32 %v2399, %v2439
    %v2441 = vpop.f32.mrf.mxu0
    %v2442 = vpop.f32.mrf.mxu0
    %v2443 = vadd.f32 %v2402, %v2442
    %v2444 = vpop.f32.mrf.mxu0
    %2445 = vdwg.mxu0
    %2446 = vmatprep.subr.bf16.mxu0 0
    %2447 = vmatpush1.bf16.msra.mxu0 %v1791
    %2448 = vmatprep.subr.bf16.mxu0 0
    %2449 = vmatpush1.bf16.msra.mxu0 %v1790
    %2450 = vmatprep.subr.bf16.mxu0 0
    %2451 = vmatpush1.bf16.msra.mxu0 %v1789
    %2452 = vmatprep.subr.bf16.mxu0 0
    %2453 = vmatpush1.bf16.msra.mxu0 %v1788
    %2454 = vmatprep.subr.bf16.mxu0 0
    %2455 = vmatpush1.bf16.msra.mxu0 %v1787
    %2456 = vmatprep.subr.bf16.mxu0 0
    %2457 = vmatpush1.bf16.msra.mxu0 %v1786
    %2458 = vmatprep.subr.bf16.mxu0 0
    %2459 = vmatpush1.bf16.msra.mxu0 %v1785
    %2460 = vmatprep.subr.bf16.mxu0 0
    %2461 = vmatpush1.bf16.msra.mxu0 %v1784
    %2462 = vmatprep.subr.bf16.mxu0 0
    %2463 = vmatpush2.bf16.msra.mxu0 %v1799
    %2464 = vmatprep.subr.bf16.mxu0 0
    %2465 = vmatpush2.bf16.msra.mxu0 %v1798
    %2466 = vmatprep.subr.bf16.mxu0 0
    %2467 = vmatpush2.bf16.msra.mxu0 %v1797
    %2468 = vmatprep.subr.bf16.mxu0 0
    %2469 = vmatpush2.bf16.msra.mxu0 %v1796
    %2470 = vmatprep.subr.bf16.mxu0 0
    %2471 = vmatpush2.bf16.msra.mxu0 %v1795
    %2472 = vmatprep.subr.bf16.mxu0 0
    %2473 = vmatpush2.bf16.msra.mxu0 %v1794
    %2474 = vmatprep.subr.bf16.mxu0 0
    %2475 = vmatpush2.bf16.msra.mxu0 %v1793
    %2476 = vmatprep.subr.bf16.mxu0 0
    %2477 = vmatpush2.bf16.msra.mxu0 %v1792
    %2478 = vmatprep.mubr.bf16.mxu0 %v126
    %2479 = vmatmul.mubr.bf16.gmra.mxu0 %v125
    %v2480 = vpop.f32.mrf.mxu0
    %v2481 = vadd.f32 %v2440, %v2480
    %v2482 = vpop.f32.mrf.mxu0
    %v2483 = vpop.f32.mrf.mxu0
    %v2484 = vadd.f32 %v2443, %v2483
    %v2485 = vpop.f32.mrf.mxu0
    %2486 = vdwg.mxu0
    %2487 = vmatprep.subr.bf16.mxu0 0
    %2488 = vmatpush1.bf16.msra.mxu0 %v1807
    %2489 = vmatprep.subr.bf16.mxu0 0
    %2490 = vmatpush1.bf16.msra.mxu0 %v1806
    %2491 = vmatprep.subr.bf16.mxu0 0
    %2492 = vmatpush1.bf16.msra.mxu0 %v1805
    %2493 = vmatprep.subr.bf16.mxu0 0
    %2494 = vmatpush1.bf16.msra.mxu0 %v1804
    %2495 = vmatprep.subr.bf16.mxu0 0
    %2496 = vmatpush1.bf16.msra.mxu0 %v1803
    %2497 = vmatprep.subr.bf16.mxu0 0
    %2498 = vmatpush1.bf16.msra.mxu0 %v1802
    %2499 = vmatprep.subr.bf16.mxu0 0
    %2500 = vmatpush1.bf16.msra.mxu0 %v1801
    %2501 = vmatprep.subr.bf16.mxu0 0
    %2502 = vmatpush1.bf16.msra.mxu0 %v1800
    %2503 = vmatprep.subr.bf16.mxu0 0
    %2504 = vmatpush2.bf16.msra.mxu0 %v1815
    %2505 = vmatprep.subr.bf16.mxu0 0
    %2506 = vmatpush2.bf16.msra.mxu0 %v1814
    %2507 = vmatprep.subr.bf16.mxu0 0
    %2508 = vmatpush2.bf16.msra.mxu0 %v1813
    %2509 = vmatprep.subr.bf16.mxu0 0
    %2510 = vmatpush2.bf16.msra.mxu0 %v1812
    %2511 = vmatprep.subr.bf16.mxu0 0
    %2512 = vmatpush2.bf16.msra.mxu0 %v1811
    %2513 = vmatprep.subr.bf16.mxu0 0
    %2514 = vmatpush2.bf16.msra.mxu0 %v1810
    %2515 = vmatprep.subr.bf16.mxu0 0
    %2516 = vmatpush2.bf16.msra.mxu0 %v1809
    %2517 = vmatprep.subr.bf16.mxu0 0
    %2518 = vmatpush2.bf16.msra.mxu0 %v1808
    %2519 = vmatprep.mubr.bf16.mxu0 %v128
    %2520 = vmatmul.mubr.bf16.gmra.mxu0 %v127
    %v2521 = vpop.f32.mrf.mxu0
    %v2522 = vadd.f32 %v2481, %v2521
    %v2523 = vpop.f32.mrf.mxu0
    %v2524 = vpop.f32.mrf.mxu0
    %v2525 = vadd.f32 %v2484, %v2524
    %v2526 = vpop.f32.mrf.mxu0
    %2527 = vdwg.mxu0
    %2528 = vmatprep.subr.bf16.mxu0 0
    %2529 = vmatpush1.bf16.msra.mxu0 %v1823
    %2530 = vmatprep.subr.bf16.mxu0 0
    %2531 = vmatpush1.bf16.msra.mxu0 %v1822
    %2532 = vmatprep.subr.bf16.mxu0 0
    %2533 = vmatpush1.bf16.msra.mxu0 %v1821
    %2534 = vmatprep.subr.bf16.mxu0 0
    %2535 = vmatpush1.bf16.msra.mxu0 %v1820
    %2536 = vmatprep.subr.bf16.mxu0 0
    %2537 = vmatpush1.bf16.msra.mxu0 %v1819
    %2538 = vmatprep.subr.bf16.mxu0 0
    %2539 = vmatpush1.bf16.msra.mxu0 %v1818
    %2540 = vmatprep.subr.bf16.mxu0 0
    %2541 = vmatpush1.bf16.msra.mxu0 %v1817
    %2542 = vmatprep.subr.bf16.mxu0 0
    %2543 = vmatpush1.bf16.msra.mxu0 %v1816
    %2544 = vmatprep.subr.bf16.mxu0 0
    %2545 = vmatpush2.bf16.msra.mxu0 %v1831
    %2546 = vmatprep.subr.bf16.mxu0 0
    %2547 = vmatpush2.bf16.msra.mxu0 %v1830
    %2548 = vmatprep.subr.bf16.mxu0 0
    %2549 = vmatpush2.bf16.msra.mxu0 %v1829
    %2550 = vmatprep.subr.bf16.mxu0 0
    %2551 = vmatpush2.bf16.msra.mxu0 %v1828
    %2552 = vmatprep.subr.bf16.mxu0 0
    %2553 = vmatpush2.bf16.msra.mxu0 %v1827
    %2554 = vmatprep.subr.bf16.mxu0 0
    %2555 = vmatpush2.bf16.msra.mxu0 %v1826
    %2556 = vmatprep.subr.bf16.mxu0 0
    %2557 = vmatpush2.bf16.msra.mxu0 %v1825
    %2558 = vmatprep.subr.bf16.mxu0 0
    %2559 = vmatpush2.bf16.msra.mxu0 %v1824
    %2560 = vmatprep.mubr.bf16.mxu0 %v130
    %2561 = vmatmul.mubr.bf16.gmra.mxu0 %v129
    %v2562 = vpop.f32.mrf.mxu0
    %v2563 = vadd.f32 %v2522, %v2562
    %v2564 = vpop.f32.mrf.mxu0
    %v2565 = vpop.f32.mrf.mxu0
    %v2566 = vadd.f32 %v2525, %v2565
    %v2567 = vpop.f32.mrf.mxu0
    %2568 = vdwg.mxu0
    %2569 = vmatprep.subr.bf16.mxu0 0
    %2570 = vmatpush1.bf16.msra.mxu0 %v1839
    %2571 = vmatprep.subr.bf16.mxu0 0
    %2572 = vmatpush1.bf16.msra.mxu0 %v1838
    %2573 = vmatprep.subr.bf16.mxu0 0
    %2574 = vmatpush1.bf16.msra.mxu0 %v1837
    %2575 = vmatprep.subr.bf16.mxu0 0
    %2576 = vmatpush1.bf16.msra.mxu0 %v1836
    %2577 = vmatprep.subr.bf16.mxu0 0
    %2578 = vmatpush1.bf16.msra.mxu0 %v1835
    %2579 = vmatprep.subr.bf16.mxu0 0
    %2580 = vmatpush1.bf16.msra.mxu0 %v1834
    %2581 = vmatprep.subr.bf16.mxu0 0
    %2582 = vmatpush1.bf16.msra.mxu0 %v1833
    %2583 = vmatprep.subr.bf16.mxu0 0
    %2584 = vmatpush1.bf16.msra.mxu0 %v1832
    %2585 = vmatprep.subr.bf16.mxu0 0
    %2586 = vmatpush2.bf16.msra.mxu0 %v1847
    %2587 = vmatprep.subr.bf16.mxu0 0
    %2588 = vmatpush2.bf16.msra.mxu0 %v1846
    %2589 = vmatprep.subr.bf16.mxu0 0
    %2590 = vmatpush2.bf16.msra.mxu0 %v1845
    %2591 = vmatprep.subr.bf16.mxu0 0
    %2592 = vmatpush2.bf16.msra.mxu0 %v1844
    %2593 = vmatprep.subr.bf16.mxu0 0
    %2594 = vmatpush2.bf16.msra.mxu0 %v1843
    %2595 = vmatprep.subr.bf16.mxu0 0
    %2596 = vmatpush2.bf16.msra.mxu0 %v1842
    %2597 = vmatprep.subr.bf16.mxu0 0
    %2598 = vmatpush2.bf16.msra.mxu0 %v1841
    %2599 = vmatprep.subr.bf16.mxu0 0
    %2600 = vmatpush2.bf16.msra.mxu0 %v1840
    %2601 = vmatprep.mubr.bf16.mxu0 %v132
    %2602 = vmatmul.mubr.bf16.gmra.mxu0 %v131
    %v2603 = vpop.f32.mrf.mxu0
    %v2604 = vadd.f32 %v2563, %v2603
    %v2605 = vpop.f32.mrf.mxu0
    %v2606 = vpop.f32.mrf.mxu0
    %v2607 = vadd.f32 %v2566, %v2606
    %v2608 = vpop.f32.mrf.mxu0
    %2609 = vdwg.mxu0
    %2610 = vmatprep.subr.bf16.mxu0 0
    %2611 = vmatpush1.bf16.msra.mxu0 %v1855
    %2612 = vmatprep.subr.bf16.mxu0 0
    %2613 = vmatpush1.bf16.msra.mxu0 %v1854
    %2614 = vmatprep.subr.bf16.mxu0 0
    %2615 = vmatpush1.bf16.msra.mxu0 %v1853
    %2616 = vmatprep.subr.bf16.mxu0 0
    %2617 = vmatpush1.bf16.msra.mxu0 %v1852
    %2618 = vmatprep.subr.bf16.mxu0 0
    %2619 = vmatpush1.bf16.msra.mxu0 %v1851
    %2620 = vmatprep.subr.bf16.mxu0 0
    %2621 = vmatpush1.bf16.msra.mxu0 %v1850
    %2622 = vmatprep.subr.bf16.mxu0 0
    %2623 = vmatpush1.bf16.msra.mxu0 %v1849
    %2624 = vmatprep.subr.bf16.mxu0 0
    %2625 = vmatpush1.bf16.msra.mxu0 %v1848
    %2626 = vmatprep.subr.bf16.mxu0 0
    %2627 = vmatpush2.bf16.msra.mxu0 %v1863
    %2628 = vmatprep.subr.bf16.mxu0 0
    %2629 = vmatpush2.bf16.msra.mxu0 %v1862
    %2630 = vmatprep.subr.bf16.mxu0 0
    %2631 = vmatpush2.bf16.msra.mxu0 %v1861
    %2632 = vmatprep.subr.bf16.mxu0 0
    %2633 = vmatpush2.bf16.msra.mxu0 %v1860
    %2634 = vmatprep.subr.bf16.mxu0 0
    %2635 = vmatpush2.bf16.msra.mxu0 %v1859
    %2636 = vmatprep.subr.bf16.mxu0 0
    %2637 = vmatpush2.bf16.msra.mxu0 %v1858
    %2638 = vmatprep.subr.bf16.mxu0 0
    %2639 = vmatpush2.bf16.msra.mxu0 %v1857
    %2640 = vmatprep.subr.bf16.mxu0 0
    %2641 = vmatpush2.bf16.msra.mxu0 %v1856
    %2642 = vmatprep.mubr.bf16.mxu0 %v134
    %2643 = vmatmul.mubr.bf16.gmra.mxu0 %v133
    %v2644 = vpop.f32.mrf.mxu0
    %v2645 = vadd.f32 %v2604, %v2644
    %v2646 = vpop.f32.mrf.mxu0
    %v2647 = vpop.f32.mrf.mxu0
    %v2648 = vadd.f32 %v2607, %v2647
    %v2649 = vpop.f32.mrf.mxu0
    %2650 = vdwg.mxu0
    %2651 = vmatprep.subr.bf16.mxu0 0
    %2652 = vmatpush1.bf16.msra.mxu0 %v1871
    %2653 = vmatprep.subr.bf16.mxu0 0
    %2654 = vmatpush1.bf16.msra.mxu0 %v1870
    %2655 = vmatprep.subr.bf16.mxu0 0
    %2656 = vmatpush1.bf16.msra.mxu0 %v1869
    %2657 = vmatprep.subr.bf16.mxu0 0
    %2658 = vmatpush1.bf16.msra.mxu0 %v1868
    %2659 = vmatprep.subr.bf16.mxu0 0
    %2660 = vmatpush1.bf16.msra.mxu0 %v1867
    %2661 = vmatprep.subr.bf16.mxu0 0
    %2662 = vmatpush1.bf16.msra.mxu0 %v1866
    %2663 = vmatprep.subr.bf16.mxu0 0
    %2664 = vmatpush1.bf16.msra.mxu0 %v1865
    %2665 = vmatprep.subr.bf16.mxu0 0
    %2666 = vmatpush1.bf16.msra.mxu0 %v1864
    %2667 = vmatprep.subr.bf16.mxu0 0
    %2668 = vmatpush2.bf16.msra.mxu0 %v1879
    %2669 = vmatprep.subr.bf16.mxu0 0
    %2670 = vmatpush2.bf16.msra.mxu0 %v1878
    %2671 = vmatprep.subr.bf16.mxu0 0
    %2672 = vmatpush2.bf16.msra.mxu0 %v1877
    %2673 = vmatprep.subr.bf16.mxu0 0
    %2674 = vmatpush2.bf16.msra.mxu0 %v1876
    %2675 = vmatprep.subr.bf16.mxu0 0
    %2676 = vmatpush2.bf16.msra.mxu0 %v1875
    %2677 = vmatprep.subr.bf16.mxu0 0
    %2678 = vmatpush2.bf16.msra.mxu0 %v1874
    %2679 = vmatprep.subr.bf16.mxu0 0
    %2680 = vmatpush2.bf16.msra.mxu0 %v1873
    %2681 = vmatprep.subr.bf16.mxu0 0
    %2682 = vmatpush2.bf16.msra.mxu0 %v1872
    %2683 = vmatprep.mubr.bf16.mxu0 %v136
    %2684 = vmatmul.mubr.bf16.gmra.mxu0 %v135
    %v2685 = vpop.f32.mrf.mxu0
    %v2686 = vadd.f32 %v2645, %v2685
    %v2687 = vpop.f32.mrf.mxu0
    %v2688 = vpop.f32.mrf.mxu0
    %v2689 = vadd.f32 %v2648, %v2688
    %v2690 = vpop.f32.mrf.mxu0
    %2691 = vdwg.mxu0
    %2692 = vmatprep.subr.bf16.mxu0 0
    %2693 = vmatpush1.bf16.msra.mxu0 %v1887
    %2694 = vmatprep.subr.bf16.mxu0 0
    %2695 = vmatpush1.bf16.msra.mxu0 %v1886
    %2696 = vmatprep.subr.bf16.mxu0 0
    %2697 = vmatpush1.bf16.msra.mxu0 %v1885
    %2698 = vmatprep.subr.bf16.mxu0 0
    %2699 = vmatpush1.bf16.msra.mxu0 %v1884
    %2700 = vmatprep.subr.bf16.mxu0 0
    %2701 = vmatpush1.bf16.msra.mxu0 %v1883
    %2702 = vmatprep.subr.bf16.mxu0 0
    %2703 = vmatpush1.bf16.msra.mxu0 %v1882
    %2704 = vmatprep.subr.bf16.mxu0 0
    %2705 = vmatpush1.bf16.msra.mxu0 %v1881
    %2706 = vmatprep.subr.bf16.mxu0 0
    %2707 = vmatpush1.bf16.msra.mxu0 %v1880
    %2708 = vmatprep.subr.bf16.mxu0 0
    %2709 = vmatpush2.bf16.msra.mxu0 %v1895
    %2710 = vmatprep.subr.bf16.mxu0 0
    %2711 = vmatpush2.bf16.msra.mxu0 %v1894
    %2712 = vmatprep.subr.bf16.mxu0 0
    %2713 = vmatpush2.bf16.msra.mxu0 %v1893
    %2714 = vmatprep.subr.bf16.mxu0 0
    %2715 = vmatpush2.bf16.msra.mxu0 %v1892
    %2716 = vmatprep.subr.bf16.mxu0 0
    %2717 = vmatpush2.bf16.msra.mxu0 %v1891
    %2718 = vmatprep.subr.bf16.mxu0 0
    %2719 = vmatpush2.bf16.msra.mxu0 %v1890
    %2720 = vmatprep.subr.bf16.mxu0 0
    %2721 = vmatpush2.bf16.msra.mxu0 %v1889
    %2722 = vmatprep.subr.bf16.mxu0 0
    %2723 = vmatpush2.bf16.msra.mxu0 %v1888
    %2724 = vmatprep.mubr.bf16.mxu0 %v138
    %2725 = vmatmul.mubr.bf16.gmra.mxu0 %v137
    %v2726 = vpop.f32.mrf.mxu0
    %v2727 = vadd.f32 %v2686, %v2726
    %v2728 = vpop.f32.mrf.mxu0
    %v2729 = vpop.f32.mrf.mxu0
    %v2730 = vadd.f32 %v2689, %v2729
    %v2731 = vpop.f32.mrf.mxu0
    %2732 = vdwg.mxu0
    %2733 = vmatprep.subr.bf16.mxu0 0
    %2734 = vmatpush1.bf16.msra.mxu0 %v1903
    %2735 = vmatprep.subr.bf16.mxu0 0
    %2736 = vmatpush1.bf16.msra.mxu0 %v1902
    %2737 = vmatprep.subr.bf16.mxu0 0
    %2738 = vmatpush1.bf16.msra.mxu0 %v1901
    %2739 = vmatprep.subr.bf16.mxu0 0
    %2740 = vmatpush1.bf16.msra.mxu0 %v1900
    %2741 = vmatprep.subr.bf16.mxu0 0
    %2742 = vmatpush1.bf16.msra.mxu0 %v1899
    %2743 = vmatprep.subr.bf16.mxu0 0
    %2744 = vmatpush1.bf16.msra.mxu0 %v1898
    %2745 = vmatprep.subr.bf16.mxu0 0
    %2746 = vmatpush1.bf16.msra.mxu0 %v1897
    %2747 = vmatprep.subr.bf16.mxu0 0
    %2748 = vmatpush1.bf16.msra.mxu0 %v1896
    %2749 = vmatprep.subr.bf16.mxu0 0
    %2750 = vmatpush2.bf16.msra.mxu0 %v1911
    %2751 = vmatprep.subr.bf16.mxu0 0
    %2752 = vmatpush2.bf16.msra.mxu0 %v1910
    %2753 = vmatprep.subr.bf16.mxu0 0
    %2754 = vmatpush2.bf16.msra.mxu0 %v1909
    %2755 = vmatprep.subr.bf16.mxu0 0
    %2756 = vmatpush2.bf16.msra.mxu0 %v1908
    %2757 = vmatprep.subr.bf16.mxu0 0
    %2758 = vmatpush2.bf16.msra.mxu0 %v1907
    %2759 = vmatprep.subr.bf16.mxu0 0
    %2760 = vmatpush2.bf16.msra.mxu0 %v1906
    %2761 = vmatprep.subr.bf16.mxu0 0
    %2762 = vmatpush2.bf16.msra.mxu0 %v1905
    %2763 = vmatprep.subr.bf16.mxu0 0
    %2764 = vmatpush2.bf16.msra.mxu0 %v1904
    %2765 = vmatprep.mubr.bf16.mxu0 %v140
    %2766 = vmatmul.mubr.bf16.gmra.mxu0 %v139
    %v2767 = vpop.f32.mrf.mxu0
    %v2768 = vadd.f32 %v2727, %v2767
    %v2769 = vpop.f32.mrf.mxu0
    %v2770 = vpop.f32.mrf.mxu0
    %v2771 = vadd.f32 %v2730, %v2770
    %v2772 = vpop.f32.mrf.mxu0
    %2773 = vdwg.mxu0
    %2774 = vmatprep.subr.bf16.mxu0 0
    %2775 = vmatpush1.bf16.msra.mxu0 %v1919
    %2776 = vmatprep.subr.bf16.mxu0 0
    %2777 = vmatpush1.bf16.msra.mxu0 %v1918
    %2778 = vmatprep.subr.bf16.mxu0 0
    %2779 = vmatpush1.bf16.msra.mxu0 %v1917
    %2780 = vmatprep.subr.bf16.mxu0 0
    %2781 = vmatpush1.bf16.msra.mxu0 %v1916
    %2782 = vmatprep.subr.bf16.mxu0 0
    %2783 = vmatpush1.bf16.msra.mxu0 %v1915
    %2784 = vmatprep.subr.bf16.mxu0 0
    %2785 = vmatpush1.bf16.msra.mxu0 %v1914
    %2786 = vmatprep.subr.bf16.mxu0 0
    %2787 = vmatpush1.bf16.msra.mxu0 %v1913
    %2788 = vmatprep.subr.bf16.mxu0 0
    %2789 = vmatpush1.bf16.msra.mxu0 %v1912
    %2790 = vmatprep.subr.bf16.mxu0 0
    %2791 = vmatpush2.bf16.msra.mxu0 %v1927
    %2792 = vmatprep.subr.bf16.mxu0 0
    %2793 = vmatpush2.bf16.msra.mxu0 %v1926
    %2794 = vmatprep.subr.bf16.mxu0 0
    %2795 = vmatpush2.bf16.msra.mxu0 %v1925
    %2796 = vmatprep.subr.bf16.mxu0 0
    %2797 = vmatpush2.bf16.msra.mxu0 %v1924
    %2798 = vmatprep.subr.bf16.mxu0 0
    %2799 = vmatpush2.bf16.msra.mxu0 %v1923
    %2800 = vmatprep.subr.bf16.mxu0 0
    %2801 = vmatpush2.bf16.msra.mxu0 %v1922
    %2802 = vmatprep.subr.bf16.mxu0 0
    %2803 = vmatpush2.bf16.msra.mxu0 %v1921
    %2804 = vmatprep.subr.bf16.mxu0 0
    %2805 = vmatpush2.bf16.msra.mxu0 %v1920
    %2806 = vmatprep.mubr.bf16.mxu0 %v142
    %2807 = vmatmul.mubr.bf16.gmra.mxu0 %v141
    %v2808 = vpop.f32.mrf.mxu0
    %v2809 = vadd.f32 %v2768, %v2808
    %v2810 = vpop.f32.mrf.mxu0
    %v2811 = vpop.f32.mrf.mxu0
    %v2812 = vadd.f32 %v2771, %v2811
    %v2813 = vpop.f32.mrf.mxu0
    %2814 = vdwg.mxu0
    %2815 = vmatprep.subr.bf16.mxu0 0
    %2816 = vmatpush1.bf16.msra.mxu0 %v1935
    %2817 = vmatprep.subr.bf16.mxu0 0
    %2818 = vmatpush1.bf16.msra.mxu0 %v1934
    %2819 = vmatprep.subr.bf16.mxu0 0
    %2820 = vmatpush1.bf16.msra.mxu0 %v1933
    %2821 = vmatprep.subr.bf16.mxu0 0
    %2822 = vmatpush1.bf16.msra.mxu0 %v1932
    %2823 = vmatprep.subr.bf16.mxu0 0
    %2824 = vmatpush1.bf16.msra.mxu0 %v1931
    %2825 = vmatprep.subr.bf16.mxu0 0
    %2826 = vmatpush1.bf16.msra.mxu0 %v1930
    %2827 = vmatprep.subr.bf16.mxu0 0
    %2828 = vmatpush1.bf16.msra.mxu0 %v1929
    %2829 = vmatprep.subr.bf16.mxu0 0
    %2830 = vmatpush1.bf16.msra.mxu0 %v1928
    %2831 = vmatprep.subr.bf16.mxu0 0
    %2832 = vmatpush2.bf16.msra.mxu0 %v1943
    %2833 = vmatprep.subr.bf16.mxu0 0
    %2834 = vmatpush2.bf16.msra.mxu0 %v1942
    %2835 = vmatprep.subr.bf16.mxu0 0
    %2836 = vmatpush2.bf16.msra.mxu0 %v1941
    %2837 = vmatprep.subr.bf16.mxu0 0
    %2838 = vmatpush2.bf16.msra.mxu0 %v1940
    %2839 = vmatprep.subr.bf16.mxu0 0
    %2840 = vmatpush2.bf16.msra.mxu0 %v1939
    %2841 = vmatprep.subr.bf16.mxu0 0
    %2842 = vmatpush2.bf16.msra.mxu0 %v1938
    %2843 = vmatprep.subr.bf16.mxu0 0
    %2844 = vmatpush2.bf16.msra.mxu0 %v1937
    %2845 = vmatprep.subr.bf16.mxu0 0
    %2846 = vmatpush2.bf16.msra.mxu0 %v1936
    %2847 = vmatprep.mubr.bf16.mxu0 %v144
    %2848 = vmatmul.mubr.bf16.gmra.mxu0 %v143
    %v2849 = vpop.f32.mrf.mxu0
    %v2850 = vadd.f32 %v2809, %v2849
    %v2851 = vpop.f32.mrf.mxu0
    %v2852 = vpop.f32.mrf.mxu0
    %v2853 = vadd.f32 %v2812, %v2852
    %v2854 = vpop.f32.mrf.mxu0
    %2855 = vdwg.mxu0
    %v2856 = vmax.f32 %v2850, 0.0
    %v2857 = vmax.f32 %v2853, 0.0
    %v2858 = vld [vmem:[%s3] sm:$0xff]
    %v2859 = vld [vmem:[%s3 + $0x8] sm:$0xff]
    %v2860 = vld [vmem:[%s3 + $0x10] sm:$0xff]
    %v2861 = vld [vmem:[%s3 + $0x18] sm:$0xff]
    %v2862 = vld [vmem:[%s3 + $0x20] sm:$0xff]
    %v2863 = vld [vmem:[%s3 + $0x28] sm:$0xff]
    %v2864 = vld [vmem:[%s3 + $0x30] sm:$0xff]
    %v2865 = vld [vmem:[%s3 + $0x38] sm:$0xff]
    %v2866 = vld [vmem:[%s3 + $0x40] sm:$0xff]
    %v2867 = vld [vmem:[%s3 + $0x48] sm:$0xff]
    %v2868 = vld [vmem:[%s3 + $0x50] sm:$0xff]
    %v2869 = vld [vmem:[%s3 + $0x58] sm:$0xff]
    %v2870 = vld [vmem:[%s3 + $0x60] sm:$0xff]
    %v2871 = vld [vmem:[%s3 + $0x68] sm:$0xff]
    %v2872 = vld [vmem:[%s3 + $0x70] sm:$0xff]
    %v2873 = vld [vmem:[%s3 + $0x78] sm:$0xff]
    %v2874 = vld [vmem:[%s4] sm:$0x1]
    %v2876 = vlaneseq
    %v2877 = vshrl.u32 %v2876, 7
    %v2878 = vsub.s32 0, %v2877
    %v2879 = vrot.slane %v2874, %v2878
    %2881 = vmatprep.subr.mxu0 0.0
    %2882 = vmatpush1.msra.mxu0 %v2873
    %2883 = vmatprep.subr.mxu0 0.0
    %2884 = vmatpush1.msra.mxu0 %v2872
    %2885 = vmatprep.subr.mxu0 0.0
    %2886 = vmatpush1.msra.mxu0 %v2871
    %2887 = vmatprep.subr.mxu0 0.0
    %2888 = vmatpush1.msra.mxu0 %v2870
    %2889 = vmatprep.subr.mxu0 0.0
    %2890 = vmatpush1.msra.mxu0 %v2869
    %2891 = vmatprep.subr.mxu0 0.0
    %2892 = vmatpush1.msra.mxu0 %v2868
    %2893 = vmatprep.subr.mxu0 0.0
    %2894 = vmatpush1.msra.mxu0 %v2867
    %2895 = vmatprep.subr.mxu0 0.0
    %2896 = vmatpush1.msra.mxu0 %v2866
    %2897 = vmatprep.subr.mxu0 0.0
    %2898 = vmatpush1.msra.mxu0 %v2865
    %2899 = vmatprep.subr.mxu0 0.0
    %2900 = vmatpush1.msra.mxu0 %v2864
    %2901 = vmatprep.subr.mxu0 0.0
    %2902 = vmatpush1.msra.mxu0 %v2863
    %2903 = vmatprep.subr.mxu0 0.0
    %2904 = vmatpush1.msra.mxu0 %v2862
    %2905 = vmatprep.subr.mxu0 0.0
    %2906 = vmatpush1.msra.mxu0 %v2861
    %2907 = vmatprep.subr.mxu0 0.0
    %2908 = vmatpush1.msra.mxu0 %v2860
    %2909 = vmatprep.subr.mxu0 0.0
    %2910 = vmatpush1.msra.mxu0 %v2859
    %2911 = vmatprep.subr.mxu0 0.0
    %2912 = vmatpush1.msra.mxu0 %v2858
    %2913 = vmatprep.subr.mxu0 0.0
    %2914 = vmatpush2.msra.mxu0 0.0
    %2915 = vmatprep.subr.mxu0 0.0
    %2916 = vmatpush2.msra.mxu0 0.0
    %2917 = vmatprep.subr.mxu0 0.0
    %2918 = vmatpush2.msra.mxu0 0.0
    %2919 = vmatprep.subr.mxu0 0.0
    %2920 = vmatpush2.msra.mxu0 0.0
    %2921 = vmatprep.subr.mxu0 0.0
    %2922 = vmatpush2.msra.mxu0 0.0
    %2923 = vmatprep.subr.mxu0 0.0
    %2924 = vmatpush2.msra.mxu0 0.0
    %2925 = vmatprep.subr.mxu0 0.0
    %2926 = vmatpush2.msra.mxu0 0.0
    %2927 = vmatprep.subr.mxu0 0.0
    %2928 = vmatpush2.msra.mxu0 0.0
    %2929 = vmatprep.subr.mxu0 0.0
    %2930 = vmatpush2.msra.mxu0 0.0
    %2931 = vmatprep.subr.mxu0 0.0
    %2932 = vmatpush2.msra.mxu0 0.0
    %2933 = vmatprep.subr.mxu0 0.0
    %2934 = vmatpush2.msra.mxu0 0.0
    %2935 = vmatprep.subr.mxu0 0.0
    %2936 = vmatpush2.msra.mxu0 0.0
    %2937 = vmatprep.subr.mxu0 0.0
    %2938 = vmatpush2.msra.mxu0 0.0
    %2939 = vmatprep.subr.mxu0 0.0
    %2940 = vmatpush2.msra.mxu0 0.0
    %2941 = vmatprep.subr.mxu0 0.0
    %2942 = vmatpush2.msra.mxu0 0.0
    %2943 = vmatprep.subr.mxu0 0.0
    %2944 = vmatpush2.msra.mxu0 0.0
    %2945 = vmatprep.mubr.f32.mxu0 0.0
    %2946 = vmatmul.mubr.f32.gmra.mxu0 %v2856
    %v2947 = vpop.f32.mrf.mxu0
    %v2948 = vadd.f32 %v2879, %v2947
    %v2949 = vpop.f32.mrf.mxu0
    %2950 = vmatprep.mubr.f32.mxu0 0.0
    %2951 = vmatmul.mubr.f32.gmra.mxu0 %v2857
    %v2952 = vpop.f32.mrf.mxu0
    %v2953 = vadd.f32 %v2879, %v2952
    %v2954 = vpop.f32.mrf.mxu0
    %2955 = vdwg.mxu0
    %vm2956 = vcmask 15360
    %2957 = vst.msk [vmem:[%s5] sm:$0xff] %vm2956, %v2948
    %2958 = vst.msk [vmem:[%s5 + $0x8] sm:$0xff] %vm2956, %v2953
    // Predicated region
    $region30: #{myreg_forward.1} parent=1 // pred_check
      _
    $region31: #{myreg_forward.1} parent=1 // pred_check_branch
      %2960 = sbr.rel (0) target = $region33
    $region32: #{myreg_forward.1} parent=1 // pred_region
      _
    $region33: #{myreg_forward.1} parent=1 // pred_fallthru
      _
    // Predicated region
    $region34: #{myreg_forward.1} parent=1 // pred_check
      _
    $region35: #{myreg_forward.1} parent=1 // pred_check_branch
      %2962 = sbr.rel (0) target = $region37
    $region36: #{myreg_forward.1} parent=1 // pred_region
      _
    $region37: #{myreg_forward.1} parent=1 // pred_fallthru
      _
    %2963 = vsyncpa [#allocation3], 1
    %2964 = vsyncpa [#allocation5], 1

</llo_original>
